<compile_context>
chip_gen: v7x
topology: tpu7x:2x2x1
jax: 0.10.0
libtpu: 0.0.40
codegen_flags: <defaults>
</compile_context>

<pallas_src>
import functools

import numpy as np
import jax
import jax.numpy as jnp
from jax.experimental import pallas as pl
from jax.experimental.pallas import tpu as pltpu

_EPS = 1e-5  # nn.BatchNorm2d default


def _round_up(x, m):
    return (x + m - 1) // m * m


def _build_tap_masks(n, h, w):
    """(8, n*h*w) f32 mask per non-center 3x3 tap: 1.0 where the tap reads a real
    pixel of the SAME image, 0.0 where it would fall into the zero padding or
    another image (implements padding=1 and isolates batch elements after the
    lane roll).  The all-ones center tap is dropped."""
    hw = h * w
    f = np.arange(n * hw)
    hh = (f // w) % h
    ww = f % w
    masks = []
    for dy in (-1, 0, 1):
        for dx in (-1, 0, 1):
            if dy == 0 and dx == 0:
                continue
            valid = (hh + dy >= 0) & (hh + dy < h) & (ww + dx >= 0) & (ww + dx < w)
            masks.append(valid.astype(np.float32))
    return np.stack(masks)


def _double_conv_kernel(x_ref, m_ref,
                        w1_ref, g1_ref, be1_ref,
                        w2_ref, g2_ref, be2_ref,
                        o_ref, col_ref,
                        *, n, h, w, c_in_p, c_mid_p):
    hw = h * w
    lanes = n * hw

    def im2col(x_cm, c):
        # x_cm: (c, lanes) f32 -> col_ref[:9*c] in bf16 (one XLU lane-roll + VPU
        # mask multiply per tap; tap blocks are 8-sublane aligned via padding).
        tap = 0
        for dy in (-1, 0, 1):
            for dx in (-1, 0, 1):
                off = dy * w + dx                       # out[:, i] = x[:, i + off]
                s = (-off) % lanes                      # np.roll convention
                shifted = x_cm if s == 0 else pltpu.roll(x_cm, shift=s, axis=1)
                if dy == 0 and dx == 0:
                    col = shifted                       # center tap: mask all-ones
                else:
                    mrow = tap if tap < 4 else tap - 1  # center row not stored
                    col = shifted * m_ref[mrow:mrow + 1, :]
                col_ref[tap * c:(tap + 1) * c, :] = col.astype(jnp.bfloat16)
                tap += 1

    def bn_relu(y, g_ref, be_ref):
        # Training-mode BatchNorm over (N, H, W) (= the lane axis here) + ReLU.
        # All elementwise math in f32.
        mean = jnp.mean(y, axis=1, keepdims=True)
        cen = y - mean
        var = jnp.mean(cen * cen, axis=1, keepdims=True)    # biased variance
        scale = g_ref[...] * jax.lax.rsqrt(var + _EPS)
        return jnp.maximum(cen * scale + be_ref[...], 0.0)

    # ---- conv1: im2col (bf16 scratch) + one MXU matmul (K = 9*C_in_p) ---------
    im2col(x_ref[...], c_in_p)
    y1 = jnp.dot(w1_ref[...], col_ref[:9 * c_in_p, :],
                 preferred_element_type=jnp.float32)
    h1 = bn_relu(y1, g1_ref, be1_ref)

    # ---- conv2: same scratch reused, one MXU matmul (K = 9*C_mid_p) -----------
    im2col(h1, c_mid_p)
    y2 = jnp.dot(w2_ref[...], col_ref[:9 * c_mid_p, :],
                 preferred_element_type=jnp.float32)
    o_ref[...] = bn_relu(y2, g2_ref, be2_ref)


@jax.jit
def double_conv(x_nchw, params):
    n, c_in, h, w = x_nchw.shape
    c_mid = params["w1"].shape[-1]
    c_out = params["w2"].shape[-1]
    hw = h * w
    c_in_p, c_mid_p, c_out_p = (_round_up(c, 8) for c in (c_in, c_mid, c_out))

    # NCHW -> channel-major (C_in_p, N*HW): one tiny XLA transpose + zero-row pad.
    x_cm = jnp.transpose(x_nchw, (1, 0, 2, 3)).reshape(c_in, n * hw)
    x_cm = jnp.pad(x_cm, ((0, c_in_p - c_in), (0, 0)))

    def pack_w(w_hwio, ci, ci_p, co, co_p):
        # (3,3,Ci,Co) -> (Co_p, 9*Ci_p) bf16; zero-padded rows/cols match the
        # zero-padded channels so results are unchanged.
        wf = jnp.transpose(w_hwio, (3, 0, 1, 2))          # (Co, ky, kx, Ci)
        wf = jnp.pad(wf, ((0, co_p - co), (0, 0), (0, 0), (0, ci_p - ci)))
        return wf.reshape(co_p, 9 * ci_p).astype(jnp.bfloat16)

    def pack_v(v, cp):                                    # per-channel BN affine
        return jnp.pad(v, (0, cp - v.shape[0])).reshape(cp, 1).astype(jnp.float32)

    w1f = pack_w(params["w1"], c_in, c_in_p, c_mid, c_mid_p)
    w2f = pack_w(params["w2"], c_mid, c_mid_p, c_out, c_out_p)
    g1, be1 = pack_v(params["g1"], c_mid_p), pack_v(params["be1"], c_mid_p)
    g2, be2 = pack_v(params["g2"], c_out_p), pack_v(params["be2"], c_out_p)
    # NOTE: conv biases b1/b2 are intentionally NOT passed to the kernel --
    # batch-stat BN's mean subtraction cancels them exactly.

    masks = jnp.asarray(_build_tap_masks(n, h, w))        # (8, N*HW) const

    kern = functools.partial(_double_conv_kernel, n=n, h=h, w=w,
                             c_in_p=c_in_p, c_mid_p=c_mid_p)
    out_cm = pl.pallas_call(
        kern,
        out_shape=jax.ShapeDtypeStruct((c_out_p, n * hw), jnp.float32),
        scratch_shapes=[
            # One shared bf16 im2col buffer for both convs (never live together).
            pltpu.VMEM((9 * max(c_in_p, c_mid_p), n * hw), jnp.bfloat16),
        ],
    )(x_cm, masks, w1f, g1, be1, w2f, g2, be2)

    # TODO(synk): for real UNet sizes, add a row-band grid axis ("parallel" in
    # dimension_semantics) with 1-row halos and per-band partial BN stats so both
    # v7x TensorCores are used and bands are sized against 64 MiB VMEM
    # (vmem_limit_bytes) with BlockSpec-driven double-buffering; at this toy size
    # a single fused invocation wins (per-step overhead would dominate).
    return out_cm[:c_out].reshape(c_out, n, h, w).transpose(1, 0, 2, 3)


# ----------------------------------------------------------------------------
# Pure-JAX reference (correctness check)
# ----------------------------------------------------------------------------
def _ref_block(x, w_hwio, b, g, be, *, conv_dtype=None, eps=_EPS):
    if conv_dtype is not None:  # mimic the kernel's bf16 MXU operand rounding
        x = x.astype(conv_dtype).astype(jnp.float32)
        w_hwio = w_hwio.astype(conv_dtype).astype(jnp.float32)
    y = jax.lax.conv_general_dilated(
        x, w_hwio, (1, 1), "SAME",
        dimension_numbers=("NCHW", "HWIO", "NCHW"),
        precision=jax.lax.Precision.HIGHEST)
    y = y + b[None, :, None, None]
    mean = jnp.mean(y, axis=(0, 2, 3), keepdims=True)
    var = jnp.mean((y - mean) ** 2, axis=(0, 2, 3), keepdims=True)
    yhat = (y - mean) * jax.lax.rsqrt(var + eps)
    return jnp.maximum(yhat * g[None, :, None, None] + be[None, :, None, None], 0.0)


def _ref_double_conv(x, p, conv_dtype=None):
    h1 = _ref_block(x, p["w1"], p["b1"], p["g1"], p["be1"], conv_dtype=conv_dtype)
    return _ref_block(h1, p["w2"], p["b2"], p["g2"], p["be2"], conv_dtype=conv_dtype)


if __name__ == "__main__":
    # DoubleConv(in_channels=4, out_channels=8) -> mid_channels = 8
    N, C_IN, C_MID, C_OUT, H, W = 2, 4, 8, 8, 16, 16

    key = jax.random.PRNGKey(0)
    ks = jax.random.split(key, 9)
    params = {
        "w1": 0.1 * jax.random.normal(ks[0], (3, 3, C_IN, C_MID), jnp.float32),
        "b1": 0.1 * jax.random.normal(ks[1], (C_MID,), jnp.float32),
        "g1": 1.0 + 0.1 * jax.random.normal(ks[2], (C_MID,), jnp.float32),
        "be1": 0.1 * jax.random.normal(ks[3], (C_MID,), jnp.float32),
        "w2": 0.1 * jax.random.normal(ks[4], (3, 3, C_MID, C_OUT), jnp.float32),
        "b2": 0.1 * jax.random.normal(ks[5], (C_OUT,), jnp.float32),
        "g2": 1.0 + 0.1 * jax.random.normal(ks[6], (C_OUT,), jnp.float32),
        "be2": 0.1 * jax.random.normal(ks[7], (C_OUT,), jnp.float32),
    }
    x = jax.random.normal(ks[8], (N, C_IN, H, W), jnp.float32)

    out = jax.block_until_ready(double_conv(x, params))
    assert out.shape == (N, C_OUT, H, W), out.shape

    # Primary check: reference with the same bf16-rounded conv operands
    # (matches the kernel's MXU feed; only accumulation-order differences left).
    ref_bf16 = jax.block_until_ready(
        _ref_double_conv(x, params, conv_dtype=jnp.bfloat16))
    err = float(jnp.max(jnp.abs(out - ref_bf16)))
    assert err < 1e-2, f"max |out - ref_bf16| = {err}"

    # Sanity guard vs. the pure-f32 module semantics (bounded bf16 drift expected).
    ref_f32 = jax.block_until_ready(_ref_double_conv(x, params))
    drift = float(jnp.max(jnp.abs(out - ref_f32)))
    assert drift < 1e-1, f"max |out - ref_f32| = {drift}"

    print("KERNEL_OK")
</pallas_src>

<mosaic_0001>
module attributes {stable_mosaic.version = 11 : i64} {
  func.func @_double_conv_kernel(%arg0: memref<8x512xf32, #tpu.memory_space<vmem>>, %arg1: memref<8x512xf32, #tpu.memory_space<vmem>>, %arg2: memref<8x72xbf16, #tpu.memory_space<vmem>>, %arg3: memref<8x1xf32, #tpu.memory_space<vmem>>, %arg4: memref<8x1xf32, #tpu.memory_space<vmem>>, %arg5: memref<8x72xbf16, #tpu.memory_space<vmem>>, %arg6: memref<8x1xf32, #tpu.memory_space<vmem>>, %arg7: memref<8x1xf32, #tpu.memory_space<vmem>>, %arg8: memref<8x512xf32, #tpu.memory_space<vmem>>, %arg9: memref<72x512xbf16, #tpu.memory_space<vmem>>) attributes {dimension_semantics = [], scalar_prefetch = 0 : i64, scratch_operands = 1 : i64, tpu.core_type = #tpu.core_type<tc>} {
    %c0 = arith.constant 0 : index
    %c0_0 = arith.constant 0 : index
    %0 = vector.load %arg0[%c0, %c0_0] : memref<8x512xf32, #tpu.memory_space<vmem>>, vector<8x512xf32>
    %c17_i32 = arith.constant 17 : i32
    %1 = tpu.dynamic_rotate %0 by %c17_i32 dim 1 : vector<8x512xf32>, i32 -> vector<8x512xf32>
    %c0_1 = arith.constant 0 : index
    %c0_2 = arith.constant 0 : index
    %2 = vector.load %arg1[%c0_1, %c0_2] : memref<8x512xf32, #tpu.memory_space<vmem>>, vector<1x512xf32>
    %3 = vector.broadcast %2 : vector<1x512xf32> to vector<8x512xf32>
    %4 = arith.mulf %1, %3 : vector<8x512xf32>
    %5 = arith.truncf %4 : vector<8x512xf32> to vector<8x512xbf16>
    %c0_3 = arith.constant 0 : index
    %c0_4 = arith.constant 0 : index
    %6 = vector.load %arg9[%c0_3, %c0_4] : memref<72x512xbf16, #tpu.memory_space<vmem>>, vector<8x512xbf16>
    tpu.vector_store %arg9[%c0_3, %c0_4], %5 {strides = array<i32>} : memref<72x512xbf16, #tpu.memory_space<vmem>>, vector<8x512xbf16>,
    %c16_i32 = arith.constant 16 : i32
    %7 = tpu.dynamic_rotate %0 by %c16_i32 dim 1 : vector<8x512xf32>, i32 -> vector<8x512xf32>
    %c1 = arith.constant 1 : index
    %c0_5 = arith.constant 0 : index
    %8 = vector.load %arg1[%c1, %c0_5] : memref<8x512xf32, #tpu.memory_space<vmem>>, vector<1x512xf32>
    %9 = vector.broadcast %8 : vector<1x512xf32> to vector<8x512xf32>
    %10 = arith.mulf %7, %9 : vector<8x512xf32>
    %11 = arith.truncf %10 : vector<8x512xf32> to vector<8x512xbf16>
    %c8 = arith.constant 8 : index
    %c0_6 = arith.constant 0 : index
    %12 = vector.load %arg9[%c8, %c0_6] : memref<72x512xbf16, #tpu.memory_space<vmem>>, vector<8x512xbf16>
    tpu.vector_store %arg9[%c8, %c0_6], %11 {strides = array<i32>} : memref<72x512xbf16, #tpu.memory_space<vmem>>, vector<8x512xbf16>,
    %c15_i32 = arith.constant 15 : i32
    %13 = tpu.dynamic_rotate %0 by %c15_i32 dim 1 : vector<8x512xf32>, i32 -> vector<8x512xf32>
    %c2 = arith.constant 2 : index
    %c0_7 = arith.constant 0 : index
    %14 = vector.load %arg1[%c2, %c0_7] : memref<8x512xf32, #tpu.memory_space<vmem>>, vector<1x512xf32>
    %15 = vector.broadcast %14 : vector<1x512xf32> to vector<8x512xf32>
    %16 = arith.mulf %13, %15 : vector<8x512xf32>
    %17 = arith.truncf %16 : vector<8x512xf32> to vector<8x512xbf16>
    %c16 = arith.constant 16 : index
    %c0_8 = arith.constant 0 : index
    %18 = vector.load %arg9[%c16, %c0_8] : memref<72x512xbf16, #tpu.memory_space<vmem>>, vector<8x512xbf16>
    tpu.vector_store %arg9[%c16, %c0_8], %17 {strides = array<i32>} : memref<72x512xbf16, #tpu.memory_space<vmem>>, vector<8x512xbf16>,
    %c1_i32 = arith.constant 1 : i32
    %19 = tpu.dynamic_rotate %0 by %c1_i32 dim 1 : vector<8x512xf32>, i32 -> vector<8x512xf32>
    %c3 = arith.constant 3 : index
    %c0_9 = arith.constant 0 : index
    %20 = vector.load %arg1[%c3, %c0_9] : memref<8x512xf32, #tpu.memory_space<vmem>>, vector<1x512xf32>
    %21 = vector.broadcast %20 : vector<1x512xf32> to vector<8x512xf32>
    %22 = arith.mulf %19, %21 : vector<8x512xf32>
    %23 = arith.truncf %22 : vector<8x512xf32> to vector<8x512xbf16>
    %c24 = arith.constant 24 : index
    %c0_10 = arith.constant 0 : index
    %24 = vector.load %arg9[%c24, %c0_10] : memref<72x512xbf16, #tpu.memory_space<vmem>>, vector<8x512xbf16>
    tpu.vector_store %arg9[%c24, %c0_10], %23 {strides = array<i32>} : memref<72x512xbf16, #tpu.memory_space<vmem>>, vector<8x512xbf16>,
    %25 = arith.truncf %0 : vector<8x512xf32> to vector<8x512xbf16>
    %c32 = arith.constant 32 : index
    %c0_11 = arith.constant 0 : index
    %26 = vector.load %arg9[%c32, %c0_11] : memref<72x512xbf16, #tpu.memory_space<vmem>>, vector<8x512xbf16>
    tpu.vector_store %arg9[%c32, %c0_11], %25 {strides = array<i32>} : memref<72x512xbf16, #tpu.memory_space<vmem>>, vector<8x512xbf16>,
    %c511_i32 = arith.constant 511 : i32
    %27 = tpu.dynamic_rotate %0 by %c511_i32 dim 1 : vector<8x512xf32>, i32 -> vector<8x512xf32>
    %c4 = arith.constant 4 : index
    %c0_12 = arith.constant 0 : index
    %28 = vector.load %arg1[%c4, %c0_12] : memref<8x512xf32, #tpu.memory_space<vmem>>, vector<1x512xf32>
    %29 = vector.broadcast %28 : vector<1x512xf32> to vector<8x512xf32>
    %30 = arith.mulf %27, %29 : vector<8x512xf32>
    %31 = arith.truncf %30 : vector<8x512xf32> to vector<8x512xbf16>
    %c40 = arith.constant 40 : index
    %c0_13 = arith.constant 0 : index
    %32 = vector.load %arg9[%c40, %c0_13] : memref<72x512xbf16, #tpu.memory_space<vmem>>, vector<8x512xbf16>
    tpu.vector_store %arg9[%c40, %c0_13], %31 {strides = array<i32>} : memref<72x512xbf16, #tpu.memory_space<vmem>>, vector<8x512xbf16>,
    %c497_i32 = arith.constant 497 : i32
    %33 = tpu.dynamic_rotate %0 by %c497_i32 dim 1 : vector<8x512xf32>, i32 -> vector<8x512xf32>
    %c5 = arith.constant 5 : index
    %c0_14 = arith.constant 0 : index
    %34 = vector.load %arg1[%c5, %c0_14] : memref<8x512xf32, #tpu.memory_space<vmem>>, vector<1x512xf32>
    %35 = vector.broadcast %34 : vector<1x512xf32> to vector<8x512xf32>
    %36 = arith.mulf %33, %35 : vector<8x512xf32>
    %37 = arith.truncf %36 : vector<8x512xf32> to vector<8x512xbf16>
    %c48 = arith.constant 48 : index
    %c0_15 = arith.constant 0 : index
    %38 = vector.load %arg9[%c48, %c0_15] : memref<72x512xbf16, #tpu.memory_space<vmem>>, vector<8x512xbf16>
    tpu.vector_store %arg9[%c48, %c0_15], %37 {strides = array<i32>} : memref<72x512xbf16, #tpu.memory_space<vmem>>, vector<8x512xbf16>,
    %c496_i32 = arith.constant 496 : i32
    %39 = tpu.dynamic_rotate %0 by %c496_i32 dim 1 : vector<8x512xf32>, i32 -> vector<8x512xf32>
    %c6 = arith.constant 6 : index
    %c0_16 = arith.constant 0 : index
    %40 = vector.load %arg1[%c6, %c0_16] : memref<8x512xf32, #tpu.memory_space<vmem>>, vector<1x512xf32>
    %41 = vector.broadcast %40 : vector<1x512xf32> to vector<8x512xf32>
    %42 = arith.mulf %39, %41 : vector<8x512xf32>
    %43 = arith.truncf %42 : vector<8x512xf32> to vector<8x512xbf16>
    %c56 = arith.constant 56 : index
    %c0_17 = arith.constant 0 : index
    %44 = vector.load %arg9[%c56, %c0_17] : memref<72x512xbf16, #tpu.memory_space<vmem>>, vector<8x512xbf16>
    tpu.vector_store %arg9[%c56, %c0_17], %43 {strides = array<i32>} : memref<72x512xbf16, #tpu.memory_space<vmem>>, vector<8x512xbf16>,
    %c495_i32 = arith.constant 495 : i32
    %45 = tpu.dynamic_rotate %0 by %c495_i32 dim 1 : vector<8x512xf32>, i32 -> vector<8x512xf32>
    %c7 = arith.constant 7 : index
    %c0_18 = arith.constant 0 : index
    %46 = vector.load %arg1[%c7, %c0_18] : memref<8x512xf32, #tpu.memory_space<vmem>>, vector<1x512xf32>
    %47 = vector.broadcast %46 : vector<1x512xf32> to vector<8x512xf32>
    %48 = arith.mulf %45, %47 : vector<8x512xf32>
    %49 = arith.truncf %48 : vector<8x512xf32> to vector<8x512xbf16>
    %c64 = arith.constant 64 : index
    %c0_19 = arith.constant 0 : index
    %50 = vector.load %arg9[%c64, %c0_19] : memref<72x512xbf16, #tpu.memory_space<vmem>>, vector<8x512xbf16>
    tpu.vector_store %arg9[%c64, %c0_19], %49 {strides = array<i32>} : memref<72x512xbf16, #tpu.memory_space<vmem>>, vector<8x512xbf16>,
    %c0_20 = arith.constant 0 : index
    %c0_21 = arith.constant 0 : index
    %51 = vector.load %arg2[%c0_20, %c0_21] : memref<8x72xbf16, #tpu.memory_space<vmem>>, vector<8x72xbf16>
    %c0_22 = arith.constant 0 : index
    %c0_23 = arith.constant 0 : index
    %52 = vector.load %arg9[%c0_22, %c0_23] : memref<72x512xbf16, #tpu.memory_space<vmem>>, vector<72x512xbf16>
    %cst = arith.constant dense<0.000000e+00> : vector<8x512xf32>
    %53 = tpu.matmul %51, %52, %cst {dimension_numbers = #tpu.dot_dimension_numbers<[1], [0], [0], [1], [0, 0, 1, 1], [], []>} : vector<8x72xbf16>, vector<72x512xbf16>, vector<8x512xf32> -> vector<8x512xf32>
    %cst_24 = arith.constant dense<0.000000e+00> : vector<8xf32>
    %54 = vector.multi_reduction <add>, %53, %cst_24 [1] : vector<8x512xf32> to vector<8xf32>
    %55 = vector.shape_cast %54 : vector<8xf32> to vector<8x1xf32>
    %cst_25 = arith.constant 5.120000e+02 : f32
    %56 = vector.broadcast %cst_25 : f32 to vector<8x1xf32>
    %57 = arith.divf %55, %56 : vector<8x1xf32>
    %58 = vector.broadcast %57 : vector<8x1xf32> to vector<8x512xf32>
    %59 = arith.subf %53, %58 : vector<8x512xf32>
    %60 = arith.mulf %59, %59 : vector<8x512xf32>
    %cst_26 = arith.constant dense<0.000000e+00> : vector<8xf32>
    %61 = vector.multi_reduction <add>, %60, %cst_26 [1] : vector<8x512xf32> to vector<8xf32>
    %62 = vector.shape_cast %61 : vector<8xf32> to vector<8x1xf32>
    %cst_27 = arith.constant 5.120000e+02 : f32
    %63 = vector.broadcast %cst_27 : f32 to vector<8x1xf32>
    %64 = arith.divf %62, %63 : vector<8x1xf32>
    %c0_28 = arith.constant 0 : index
    %c0_29 = arith.constant 0 : index
    %65 = vector.load %arg3[%c0_28, %c0_29] : memref<8x1xf32, #tpu.memory_space<vmem>>, vector<8x1xf32>
    %cst_30 = arith.constant 9.99999974E-6 : f32
    %66 = vector.broadcast %cst_30 : f32 to vector<8x1xf32>
    %67 = arith.addf %64, %66 : vector<8x1xf32>
    %68 = math.rsqrt %67 : vector<8x1xf32>
    %69 = arith.mulf %65, %68 : vector<8x1xf32>
    %70 = vector.broadcast %69 : vector<8x1xf32> to vector<8x512xf32>
    %71 = arith.mulf %59, %70 : vector<8x512xf32>
    %c0_31 = arith.constant 0 : index
    %c0_32 = arith.constant 0 : index
    %72 = vector.load %arg4[%c0_31, %c0_32] : memref<8x1xf32, #tpu.memory_space<vmem>>, vector<8x1xf32>
    %73 = vector.broadcast %72 : vector<8x1xf32> to vector<8x512xf32>
    %74 = arith.addf %71, %73 : vector<8x512xf32>
    %cst_33 = arith.constant 0.000000e+00 : f32
    %75 = vector.broadcast %cst_33 : f32 to vector<8x512xf32>
    %76 = arith.maximumf %74, %75 : vector<8x512xf32>
    %c17_i32_34 = arith.constant 17 : i32
    %77 = tpu.dynamic_rotate %76 by %c17_i32_34 dim 1 : vector<8x512xf32>, i32 -> vector<8x512xf32>
    %c0_35 = arith.constant 0 : index
    %c0_36 = arith.constant 0 : index
    %78 = vector.load %arg1[%c0_35, %c0_36] : memref<8x512xf32, #tpu.memory_space<vmem>>, vector<1x512xf32>
    %79 = vector.broadcast %78 : vector<1x512xf32> to vector<8x512xf32>
    %80 = arith.mulf %77, %79 : vector<8x512xf32>
    %81 = arith.truncf %80 : vector<8x512xf32> to vector<8x512xbf16>
    %c0_37 = arith.constant 0 : index
    %c0_38 = arith.constant 0 : index
    %82 = vector.load %arg9[%c0_37, %c0_38] : memref<72x512xbf16, #tpu.memory_space<vmem>>, vector<8x512xbf16>
    tpu.vector_store %arg9[%c0_37, %c0_38], %81 {strides = array<i32>} : memref<72x512xbf16, #tpu.memory_space<vmem>>, vector<8x512xbf16>,
    %c16_i32_39 = arith.constant 16 : i32
    %83 = tpu.dynamic_rotate %76 by %c16_i32_39 dim 1 : vector<8x512xf32>, i32 -> vector<8x512xf32>
    %c1_40 = arith.constant 1 : index
    %c0_41 = arith.constant 0 : index
    %84 = vector.load %arg1[%c1_40, %c0_41] : memref<8x512xf32, #tpu.memory_space<vmem>>, vector<1x512xf32>
    %85 = vector.broadcast %84 : vector<1x512xf32> to vector<8x512xf32>
    %86 = arith.mulf %83, %85 : vector<8x512xf32>
    %87 = arith.truncf %86 : vector<8x512xf32> to vector<8x512xbf16>
    %c8_42 = arith.constant 8 : index
    %c0_43 = arith.constant 0 : index
    %88 = vector.load %arg9[%c8_42, %c0_43] : memref<72x512xbf16, #tpu.memory_space<vmem>>, vector<8x512xbf16>
    tpu.vector_store %arg9[%c8_42, %c0_43], %87 {strides = array<i32>} : memref<72x512xbf16, #tpu.memory_space<vmem>>, vector<8x512xbf16>,
    %c15_i32_44 = arith.constant 15 : i32
    %89 = tpu.dynamic_rotate %76 by %c15_i32_44 dim 1 : vector<8x512xf32>, i32 -> vector<8x512xf32>
    %c2_45 = arith.constant 2 : index
    %c0_46 = arith.constant 0 : index
    %90 = vector.load %arg1[%c2_45, %c0_46] : memref<8x512xf32, #tpu.memory_space<vmem>>, vector<1x512xf32>
    %91 = vector.broadcast %90 : vector<1x512xf32> to vector<8x512xf32>
    %92 = arith.mulf %89, %91 : vector<8x512xf32>
    %93 = arith.truncf %92 : vector<8x512xf32> to vector<8x512xbf16>
    %c16_47 = arith.constant 16 : index
    %c0_48 = arith.constant 0 : index
    %94 = vector.load %arg9[%c16_47, %c0_48] : memref<72x512xbf16, #tpu.memory_space<vmem>>, vector<8x512xbf16>
    tpu.vector_store %arg9[%c16_47, %c0_48], %93 {strides = array<i32>} : memref<72x512xbf16, #tpu.memory_space<vmem>>, vector<8x512xbf16>,
    %c1_i32_49 = arith.constant 1 : i32
    %95 = tpu.dynamic_rotate %76 by %c1_i32_49 dim 1 : vector<8x512xf32>, i32 -> vector<8x512xf32>
    %c3_50 = arith.constant 3 : index
    %c0_51 = arith.constant 0 : index
    %96 = vector.load %arg1[%c3_50, %c0_51] : memref<8x512xf32, #tpu.memory_space<vmem>>, vector<1x512xf32>
    %97 = vector.broadcast %96 : vector<1x512xf32> to vector<8x512xf32>
    %98 = arith.mulf %95, %97 : vector<8x512xf32>
    %99 = arith.truncf %98 : vector<8x512xf32> to vector<8x512xbf16>
    %c24_52 = arith.constant 24 : index
    %c0_53 = arith.constant 0 : index
    %100 = vector.load %arg9[%c24_52, %c0_53] : memref<72x512xbf16, #tpu.memory_space<vmem>>, vector<8x512xbf16>
    tpu.vector_store %arg9[%c24_52, %c0_53], %99 {strides = array<i32>} : memref<72x512xbf16, #tpu.memory_space<vmem>>, vector<8x512xbf16>,
    %101 = arith.truncf %76 : vector<8x512xf32> to vector<8x512xbf16>
    %c32_54 = arith.constant 32 : index
    %c0_55 = arith.constant 0 : index
    %102 = vector.load %arg9[%c32_54, %c0_55] : memref<72x512xbf16, #tpu.memory_space<vmem>>, vector<8x512xbf16>
    tpu.vector_store %arg9[%c32_54, %c0_55], %101 {strides = array<i32>} : memref<72x512xbf16, #tpu.memory_space<vmem>>, vector<8x512xbf16>,
    %c511_i32_56 = arith.constant 511 : i32
    %103 = tpu.dynamic_rotate %76 by %c511_i32_56 dim 1 : vector<8x512xf32>, i32 -> vector<8x512xf32>
    %c4_57 = arith.constant 4 : index
    %c0_58 = arith.constant 0 : index
    %104 = vector.load %arg1[%c4_57, %c0_58] : memref<8x512xf32, #tpu.memory_space<vmem>>, vector<1x512xf32>
    %105 = vector.broadcast %104 : vector<1x512xf32> to vector<8x512xf32>
    %106 = arith.mulf %103, %105 : vector<8x512xf32>
    %107 = arith.truncf %106 : vector<8x512xf32> to vector<8x512xbf16>
    %c40_59 = arith.constant 40 : index
    %c0_60 = arith.constant 0 : index
    %108 = vector.load %arg9[%c40_59, %c0_60] : memref<72x512xbf16, #tpu.memory_space<vmem>>, vector<8x512xbf16>
    tpu.vector_store %arg9[%c40_59, %c0_60], %107 {strides = array<i32>} : memref<72x512xbf16, #tpu.memory_space<vmem>>, vector<8x512xbf16>,
    %c497_i32_61 = arith.constant 497 : i32
    %109 = tpu.dynamic_rotate %76 by %c497_i32_61 dim 1 : vector<8x512xf32>, i32 -> vector<8x512xf32>
    %c5_62 = arith.constant 5 : index
    %c0_63 = arith.constant 0 : index
    %110 = vector.load %arg1[%c5_62, %c0_63] : memref<8x512xf32, #tpu.memory_space<vmem>>, vector<1x512xf32>
    %111 = vector.broadcast %110 : vector<1x512xf32> to vector<8x512xf32>
    %112 = arith.mulf %109, %111 : vector<8x512xf32>
    %113 = arith.truncf %112 : vector<8x512xf32> to vector<8x512xbf16>
    %c48_64 = arith.constant 48 : index
    %c0_65 = arith.constant 0 : index
    %114 = vector.load %arg9[%c48_64, %c0_65] : memref<72x512xbf16, #tpu.memory_space<vmem>>, vector<8x512xbf16>
    tpu.vector_store %arg9[%c48_64, %c0_65], %113 {strides = array<i32>} : memref<72x512xbf16, #tpu.memory_space<vmem>>, vector<8x512xbf16>,
    %c496_i32_66 = arith.constant 496 : i32
    %115 = tpu.dynamic_rotate %76 by %c496_i32_66 dim 1 : vector<8x512xf32>, i32 -> vector<8x512xf32>
    %c6_67 = arith.constant 6 : index
    %c0_68 = arith.constant 0 : index
    %116 = vector.load %arg1[%c6_67, %c0_68] : memref<8x512xf32, #tpu.memory_space<vmem>>, vector<1x512xf32>
    %117 = vector.broadcast %116 : vector<1x512xf32> to vector<8x512xf32>
    %118 = arith.mulf %115, %117 : vector<8x512xf32>
    %119 = arith.truncf %118 : vector<8x512xf32> to vector<8x512xbf16>
    %c56_69 = arith.constant 56 : index
    %c0_70 = arith.constant 0 : index
    %120 = vector.load %arg9[%c56_69, %c0_70] : memref<72x512xbf16, #tpu.memory_space<vmem>>, vector<8x512xbf16>
    tpu.vector_store %arg9[%c56_69, %c0_70], %119 {strides = array<i32>} : memref<72x512xbf16, #tpu.memory_space<vmem>>, vector<8x512xbf16>,
    %c495_i32_71 = arith.constant 495 : i32
    %121 = tpu.dynamic_rotate %76 by %c495_i32_71 dim 1 : vector<8x512xf32>, i32 -> vector<8x512xf32>
    %c7_72 = arith.constant 7 : index
    %c0_73 = arith.constant 0 : index
    %122 = vector.load %arg1[%c7_72, %c0_73] : memref<8x512xf32, #tpu.memory_space<vmem>>, vector<1x512xf32>
    %123 = vector.broadcast %122 : vector<1x512xf32> to vector<8x512xf32>
    %124 = arith.mulf %121, %123 : vector<8x512xf32>
    %125 = arith.truncf %124 : vector<8x512xf32> to vector<8x512xbf16>
    %c64_74 = arith.constant 64 : index
    %c0_75 = arith.constant 0 : index
    %126 = vector.load %arg9[%c64_74, %c0_75] : memref<72x512xbf16, #tpu.memory_space<vmem>>, vector<8x512xbf16>
    tpu.vector_store %arg9[%c64_74, %c0_75], %125 {strides = array<i32>} : memref<72x512xbf16, #tpu.memory_space<vmem>>, vector<8x512xbf16>,
    %c0_76 = arith.constant 0 : index
    %c0_77 = arith.constant 0 : index
    %127 = vector.load %arg5[%c0_76, %c0_77] : memref<8x72xbf16, #tpu.memory_space<vmem>>, vector<8x72xbf16>
    %c0_78 = arith.constant 0 : index
    %c0_79 = arith.constant 0 : index
    %128 = vector.load %arg9[%c0_78, %c0_79] : memref<72x512xbf16, #tpu.memory_space<vmem>>, vector<72x512xbf16>
    %cst_80 = arith.constant dense<0.000000e+00> : vector<8x512xf32>
    %129 = tpu.matmul %127, %128, %cst_80 {dimension_numbers = #tpu.dot_dimension_numbers<[1], [0], [0], [1], [0, 0, 1, 1], [], []>} : vector<8x72xbf16>, vector<72x512xbf16>, vector<8x512xf32> -> vector<8x512xf32>
    %cst_81 = arith.constant dense<0.000000e+00> : vector<8xf32>
    %130 = vector.multi_reduction <add>, %129, %cst_81 [1] : vector<8x512xf32> to vector<8xf32>
    %131 = vector.shape_cast %130 : vector<8xf32> to vector<8x1xf32>
    %cst_82 = arith.constant 5.120000e+02 : f32
    %132 = vector.broadcast %cst_82 : f32 to vector<8x1xf32>
    %133 = arith.divf %131, %132 : vector<8x1xf32>
    %134 = vector.broadcast %133 : vector<8x1xf32> to vector<8x512xf32>
    %135 = arith.subf %129, %134 : vector<8x512xf32>
    %136 = arith.mulf %135, %135 : vector<8x512xf32>
    %cst_83 = arith.constant dense<0.000000e+00> : vector<8xf32>
    %137 = vector.multi_reduction <add>, %136, %cst_83 [1] : vector<8x512xf32> to vector<8xf32>
    %138 = vector.shape_cast %137 : vector<8xf32> to vector<8x1xf32>
    %cst_84 = arith.constant 5.120000e+02 : f32
    %139 = vector.broadcast %cst_84 : f32 to vector<8x1xf32>
    %140 = arith.divf %138, %139 : vector<8x1xf32>
    %c0_85 = arith.constant 0 : index
    %c0_86 = arith.constant 0 : index
    %141 = vector.load %arg6[%c0_85, %c0_86] : memref<8x1xf32, #tpu.memory_space<vmem>>, vector<8x1xf32>
    %cst_87 = arith.constant 9.99999974E-6 : f32
    %142 = vector.broadcast %cst_87 : f32 to vector<8x1xf32>
    %143 = arith.addf %140, %142 : vector<8x1xf32>
    %144 = math.rsqrt %143 : vector<8x1xf32>
    %145 = arith.mulf %141, %144 : vector<8x1xf32>
    %146 = vector.broadcast %145 : vector<8x1xf32> to vector<8x512xf32>
    %147 = arith.mulf %135, %146 : vector<8x512xf32>
    %c0_88 = arith.constant 0 : index
    %c0_89 = arith.constant 0 : index
    %148 = vector.load %arg7[%c0_88, %c0_89] : memref<8x1xf32, #tpu.memory_space<vmem>>, vector<8x1xf32>
    %149 = vector.broadcast %148 : vector<8x1xf32> to vector<8x512xf32>
    %150 = arith.addf %147, %149 : vector<8x512xf32>
    %cst_90 = arith.constant 0.000000e+00 : f32
    %151 = vector.broadcast %cst_90 : f32 to vector<8x512xf32>
    %152 = arith.maximumf %150, %151 : vector<8x512xf32>
    %c0_91 = arith.constant 0 : index
    %c0_92 = arith.constant 0 : index
    %153 = vector.load %arg8[%c0_91, %c0_92] : memref<8x512xf32, #tpu.memory_space<vmem>>, vector<8x512xf32>
    tpu.vector_store %arg8[%c0_91, %c0_92], %152 {strides = array<i32>} : memref<8x512xf32, #tpu.memory_space<vmem>>, vector<8x512xf32>,
    return
  }
}

</mosaic_0001>

<llo_original>
// kernel: double_conv.1
$region0: #{double_conv.1}
  #allocation0 [shape = 'u32[]', space=smem, size = 0x4, offset = 0x4, fixed_abs, tag = 'smem constant byte address 0x4 - core index']
  #allocation1 [shape = 'u32[144,128]{1,0:T(1,128)}', space=vmem, size = 0x12000, scoped, tag = 'internal scratch']
  #allocation2 [shape = 'bf16[72,512]{1,0:T(8,128)(2,1)}', space=vmem, size = 0x12000, scoped, tag = 'scratch operand']
  %s0 = inlined_call_operand.vmem [shape: f32[8,512], index: 0, kind: input, shape index: {}]
  %s1 = inlined_call_operand.vmem [shape: f32[8,512], index: 1, kind: input, shape index: {}]
  %s2 = inlined_call_operand.vmem [shape: bf16[8,72], index: 2, kind: input, shape index: {}]
  %s3 = inlined_call_operand.vmem [shape: f32[8,1], index: 3, kind: input, shape index: {}]
  %s4 = inlined_call_operand.vmem [shape: f32[8,1], index: 4, kind: input, shape index: {}]
  %s5 = inlined_call_operand.vmem [shape: bf16[8,72], index: 5, kind: input, shape index: {}]
  %s6 = inlined_call_operand.vmem [shape: f32[8,1], index: 6, kind: input, shape index: {}]
  %s7 = inlined_call_operand.vmem [shape: f32[8,1], index: 7, kind: input, shape index: {}]
  %s8 = inlined_call_operand.vmem [shape: f32[8,512], index: 8, kind: output, shape index: {}]
  %s9 = sld [smem:[#allocation0]]
  $region42: #{double_conv.1} parent=0
    _
  %s11 = ssub.s32 1, %s9
  %s12 = scalar_select 0, %s11, %s9
  // Predicated region
  $region2: #{double_conv.1} parent=0 // pred_check
    _
  $region3: #{double_conv.1} parent=0 // pred_check_branch
    %14 = sbr.rel (0) target = $region5
  $region4: #{double_conv.1} parent=0 // pred_region
    _
  $region5: #{double_conv.1} parent=0 // pred_fallthru
    _
  // Predicated region
  $region6: #{double_conv.1} parent=0 // pred_check
    _
  $region7: #{double_conv.1} parent=0 // pred_check_branch
    %16 = sbr.rel (0) target = $region9
  $region8: #{double_conv.1} parent=0 // pred_region
    _
  $region9: #{double_conv.1} parent=0 // pred_fallthru
    _
  // Predicated region
  $region10: #{double_conv.1} parent=0 // pred_check
    _
  $region11: #{double_conv.1} parent=0 // pred_check_branch
    %18 = sbr.rel (0) target = $region13
  $region12: #{double_conv.1} parent=0 // pred_region
    _
  $region13: #{double_conv.1} parent=0 // pred_fallthru
    _
  // Predicated region
  $region14: #{double_conv.1} parent=0 // pred_check
    _
  $region15: #{double_conv.1} parent=0 // pred_check_branch
    %20 = sbr.rel (0) target = $region17
  $region16: #{double_conv.1} parent=0 // pred_region
    _
  $region17: #{double_conv.1} parent=0 // pred_fallthru
    _
  // Predicated region
  $region18: #{double_conv.1} parent=0 // pred_check
    _
  $region19: #{double_conv.1} parent=0 // pred_check_branch
    %22 = sbr.rel (0) target = $region21
  $region20: #{double_conv.1} parent=0 // pred_region
    _
  $region21: #{double_conv.1} parent=0 // pred_fallthru
    _
  // Predicated region
  $region22: #{double_conv.1} parent=0 // pred_check
    _
  $region23: #{double_conv.1} parent=0 // pred_check_branch
    %24 = sbr.rel (0) target = $region25
  $region24: #{double_conv.1} parent=0 // pred_region
    _
  $region25: #{double_conv.1} parent=0 // pred_fallthru
    _
  // Predicated region
  $region26: #{double_conv.1} parent=0 // pred_check
    _
  $region27: #{double_conv.1} parent=0 // pred_check_branch
    %26 = sbr.rel (0) target = $region29
  $region28: #{double_conv.1} parent=0 // pred_region
    _
  $region29: #{double_conv.1} parent=0 // pred_fallthru
    _
  // Predicated region
  $region30: #{double_conv.1} parent=0 // pred_check
    _
  $region31: #{double_conv.1} parent=0 // pred_check_branch
    %28 = sbr.rel (0) target = $region33
  $region32: #{double_conv.1} parent=0 // pred_region
    _
  $region33: #{double_conv.1} parent=0 // pred_fallthru
    _
  %v30 = vld [vmem:[%s0] sm:$0xff]
  %v31 = vld [vmem:[%s0 + $0x8] sm:$0xff]
  %v32 = vld [vmem:[%s0 + $0x10] sm:$0xff]
  %v33 = vld [vmem:[%s0 + $0x18] sm:$0xff]
  %34 = vrot.lane.b32.xlu0 %v30, 17
  %v35 = vpop.permute.xlu0 %34
  %36 = vrot.lane.b32.xlu0 %v31, 17
  %v37 = vpop.permute.xlu0 %36
  %38 = vrot.lane.b32.xlu0 %v32, 17
  %v39 = vpop.permute.xlu0 %38
  %40 = vrot.lane.b32.xlu0 %v33, 17
  %v41 = vpop.permute.xlu0 %40
  %v42 = vlaneseq
  %v43 = vand.u32 %v42, 127
  %vm44 = vcmp.lt.s32.totalorder %v43, 17
  %v45 = vsel %vm44, %v39, %v41
  %v46 = vsel %vm44, %v37, %v39
  %v47 = vsel %vm44, %v35, %v37
  %v48 = vsel %vm44, %v41, %v35
  %v49 = vld [vmem:[%s1] ss:$8 sm:$0xf]
  %v51 = vlaneseq
  %v52 = vshrl.u32 %v51, 7
  %v53 = vsub.s32 0, %v52
  %v54 = vrot.slane %v49, %v53
  %v55 = vlaneseq
  %v56 = vshrl.u32 %v55, 7
  %v57 = vsub.s32 1, %v56
  %v58 = vrot.slane %v49, %v57
  %v59 = vlaneseq
  %v60 = vshrl.u32 %v59, 7
  %v61 = vsub.s32 2, %v60
  %v62 = vrot.slane %v49, %v61
  %v63 = vlaneseq
  %v64 = vshrl.u32 %v63, 7
  %v65 = vsub.s32 3, %v64
  %v66 = vrot.slane %v49, %v65
  %v71 = vmul.f32 %v48, %v54
  %v72 = vmul.f32 %v47, %v58
  %v73 = vmul.f32 %v46, %v62
  %v74 = vmul.f32 %v45, %v66
  %v75 = vpack.c.bf16 %v71, %v71
  %v76 = vpack.c.bf16 %v72, %v72
  %v77 = vpack.c.bf16 %v73, %v73
  %v78 = vpack.c.bf16 %v74, %v74
  %v83 = vunpack.c.l.b16 %v75
  %v84 = vunpack.c.l.b16 %v76
  %v85 = vunpack.c.l.b16 %v77
  %v86 = vunpack.c.l.b16 %v78
  %v87 = vpack.c.b16 %v84, %v83
  %v88 = vpack.c.b16 %v86, %v85
  %91 = vst [vmem:[#allocation2] sm:$0xff] %v87
  %92 = vst [vmem:[#allocation2 + $0x8] sm:$0xff] %v88
  %93 = vrot.lane.b32.xlu0 %v30, 16
  %v94 = vpop.permute.xlu0 %93
  %95 = vrot.lane.b32.xlu0 %v31, 16
  %v96 = vpop.permute.xlu0 %95
  %97 = vrot.lane.b32.xlu0 %v32, 16
  %v98 = vpop.permute.xlu0 %97
  %99 = vrot.lane.b32.xlu0 %v33, 16
  %v100 = vpop.permute.xlu0 %99
  %vm101 = vcmp.lt.s32.totalorder %v43, 16
  %v102 = vsel %vm101, %v98, %v100
  %v103 = vsel %vm101, %v96, %v98
  %v104 = vsel %vm101, %v94, %v96
  %v105 = vsel %vm101, %v100, %v94
  %s106 = scalar_lea.vmem %s1, 1
  %v107 = vld [vmem:[%s106] ss:$8 sm:$0xf]
  %v109 = vlaneseq
  %v110 = vshrl.u32 %v109, 7
  %v111 = vsub.s32 0, %v110
  %v112 = vrot.slane %v107, %v111
  %v113 = vlaneseq
  %v114 = vshrl.u32 %v113, 7
  %v115 = vsub.s32 1, %v114
  %v116 = vrot.slane %v107, %v115
  %v117 = vlaneseq
  %v118 = vshrl.u32 %v117, 7
  %v119 = vsub.s32 2, %v118
  %v120 = vrot.slane %v107, %v119
  %v121 = vlaneseq
  %v122 = vshrl.u32 %v121, 7
  %v123 = vsub.s32 3, %v122
  %v124 = vrot.slane %v107, %v123
  %v129 = vmul.f32 %v105, %v112
  %v130 = vmul.f32 %v104, %v116
  %v131 = vmul.f32 %v103, %v120
  %v132 = vmul.f32 %v102, %v124
  %v133 = vpack.c.bf16 %v129, %v129
  %v134 = vpack.c.bf16 %v130, %v130
  %v135 = vpack.c.bf16 %v131, %v131
  %v136 = vpack.c.bf16 %v132, %v132
  %v141 = vunpack.c.l.b16 %v133
  %v142 = vunpack.c.l.b16 %v134
  %v143 = vunpack.c.l.b16 %v135
  %v144 = vunpack.c.l.b16 %v136
  %v145 = vpack.c.b16 %v142, %v141
  %v146 = vpack.c.b16 %v144, %v143
  %149 = vst [vmem:[#allocation2 + $0x10] sm:$0xff] %v145
  %150 = vst [vmem:[#allocation2 + $0x18] sm:$0xff] %v146
  %151 = vrot.lane.b32.xlu0 %v30, 15
  %v152 = vpop.permute.xlu0 %151
  %153 = vrot.lane.b32.xlu0 %v31, 15
  %v154 = vpop.permute.xlu0 %153
  %155 = vrot.lane.b32.xlu0 %v32, 15
  %v156 = vpop.permute.xlu0 %155
  %157 = vrot.lane.b32.xlu0 %v33, 15
  %v158 = vpop.permute.xlu0 %157
  %vm159 = vcmp.lt.s32.totalorder %v43, 15
  %v160 = vsel %vm159, %v156, %v158
  %v161 = vsel %vm159, %v154, %v156
  %v162 = vsel %vm159, %v152, %v154
  %v163 = vsel %vm159, %v158, %v152
  %s164 = scalar_lea.vmem %s1, 2
  %v165 = vld [vmem:[%s164] ss:$8 sm:$0xf]
  %v167 = vlaneseq
  %v168 = vshrl.u32 %v167, 7
  %v169 = vsub.s32 0, %v168
  %v170 = vrot.slane %v165, %v169
  %v171 = vlaneseq
  %v172 = vshrl.u32 %v171, 7
  %v173 = vsub.s32 1, %v172
  %v174 = vrot.slane %v165, %v173
  %v175 = vlaneseq
  %v176 = vshrl.u32 %v175, 7
  %v177 = vsub.s32 2, %v176
  %v178 = vrot.slane %v165, %v177
  %v179 = vlaneseq
  %v180 = vshrl.u32 %v179, 7
  %v181 = vsub.s32 3, %v180
  %v182 = vrot.slane %v165, %v181
  %v187 = vmul.f32 %v163, %v170
  %v188 = vmul.f32 %v162, %v174
  %v189 = vmul.f32 %v161, %v178
  %v190 = vmul.f32 %v160, %v182
  %v191 = vpack.c.bf16 %v187, %v187
  %v192 = vpack.c.bf16 %v188, %v188
  %v193 = vpack.c.bf16 %v189, %v189
  %v194 = vpack.c.bf16 %v190, %v190
  %v199 = vunpack.c.l.b16 %v191
  %v200 = vunpack.c.l.b16 %v192
  %v201 = vunpack.c.l.b16 %v193
  %v202 = vunpack.c.l.b16 %v194
  %v203 = vpack.c.b16 %v200, %v199
  %v204 = vpack.c.b16 %v202, %v201
  %207 = vst [vmem:[#allocation2 + $0x20] sm:$0xff] %v203
  %208 = vst [vmem:[#allocation2 + $0x28] sm:$0xff] %v204
  %209 = vrot.lane.b32.xlu0 %v30, 1
  %v210 = vpop.permute.xlu0 %209
  %211 = vrot.lane.b32.xlu0 %v31, 1
  %v212 = vpop.permute.xlu0 %211
  %213 = vrot.lane.b32.xlu0 %v32, 1
  %v214 = vpop.permute.xlu0 %213
  %215 = vrot.lane.b32.xlu0 %v33, 1
  %v216 = vpop.permute.xlu0 %215
  %vm217 = vcmp.lt.s32.totalorder %v43, 1
  %v218 = vsel %vm217, %v214, %v216
  %v219 = vsel %vm217, %v212, %v214
  %v220 = vsel %vm217, %v210, %v212
  %v221 = vsel %vm217, %v216, %v210
  %s222 = scalar_lea.vmem %s1, 3
  %v223 = vld [vmem:[%s222] ss:$8 sm:$0xf]
  %v225 = vlaneseq
  %v226 = vshrl.u32 %v225, 7
  %v227 = vsub.s32 0, %v226
  %v228 = vrot.slane %v223, %v227
  %v229 = vlaneseq
  %v230 = vshrl.u32 %v229, 7
  %v231 = vsub.s32 1, %v230
  %v232 = vrot.slane %v223, %v231
  %v233 = vlaneseq
  %v234 = vshrl.u32 %v233, 7
  %v235 = vsub.s32 2, %v234
  %v236 = vrot.slane %v223, %v235
  %v237 = vlaneseq
  %v238 = vshrl.u32 %v237, 7
  %v239 = vsub.s32 3, %v238
  %v240 = vrot.slane %v223, %v239
  %v245 = vmul.f32 %v221, %v228
  %v246 = vmul.f32 %v220, %v232
  %v247 = vmul.f32 %v219, %v236
  %v248 = vmul.f32 %v218, %v240
  %v249 = vpack.c.bf16 %v245, %v245
  %v250 = vpack.c.bf16 %v246, %v246
  %v251 = vpack.c.bf16 %v247, %v247
  %v252 = vpack.c.bf16 %v248, %v248
  %v257 = vunpack.c.l.b16 %v249
  %v258 = vunpack.c.l.b16 %v250
  %v259 = vunpack.c.l.b16 %v251
  %v260 = vunpack.c.l.b16 %v252
  %v261 = vpack.c.b16 %v258, %v257
  %v262 = vpack.c.b16 %v260, %v259
  %265 = vst [vmem:[#allocation2 + $0x30] sm:$0xff] %v261
  %266 = vst [vmem:[#allocation2 + $0x38] sm:$0xff] %v262
  %v267 = vpack.c.bf16 %v30, %v30
  %v268 = vpack.c.bf16 %v31, %v31
  %v269 = vpack.c.bf16 %v32, %v32
  %v270 = vpack.c.bf16 %v33, %v33
  %v275 = vunpack.c.l.b16 %v267
  %v276 = vunpack.c.l.b16 %v268
  %v277 = vunpack.c.l.b16 %v269
  %v278 = vunpack.c.l.b16 %v270
  %v279 = vpack.c.b16 %v276, %v275
  %v280 = vpack.c.b16 %v278, %v277
  %283 = vst [vmem:[#allocation2 + $0x40] sm:$0xff] %v279
  %284 = vst [vmem:[#allocation2 + $0x48] sm:$0xff] %v280
  %285 = vrot.lane.b32.xlu0 %v30, 127
  %v286 = vpop.permute.xlu0 %285
  %287 = vrot.lane.b32.xlu0 %v31, 127
  %v288 = vpop.permute.xlu0 %287
  %289 = vrot.lane.b32.xlu0 %v32, 127
  %v290 = vpop.permute.xlu0 %289
  %291 = vrot.lane.b32.xlu0 %v33, 127
  %v292 = vpop.permute.xlu0 %291
  %vm293 = vcmp.lt.s32.totalorder %v43, 127
  %v294 = vsel %vm293, %v290, %v292
  %v295 = vsel %vm293, %v288, %v290
  %v296 = vsel %vm293, %v286, %v288
  %v297 = vsel %vm293, %v292, %v286
  %s298 = scalar_lea.vmem %s1, 4
  %v299 = vld [vmem:[%s298] ss:$8 sm:$0xf]
  %v301 = vlaneseq
  %v302 = vshrl.u32 %v301, 7
  %v303 = vsub.s32 0, %v302
  %v304 = vrot.slane %v299, %v303
  %v305 = vlaneseq
  %v306 = vshrl.u32 %v305, 7
  %v307 = vsub.s32 1, %v306
  %v308 = vrot.slane %v299, %v307
  %v309 = vlaneseq
  %v310 = vshrl.u32 %v309, 7
  %v311 = vsub.s32 2, %v310
  %v312 = vrot.slane %v299, %v311
  %v313 = vlaneseq
  %v314 = vshrl.u32 %v313, 7
  %v315 = vsub.s32 3, %v314
  %v316 = vrot.slane %v299, %v315
  %v321 = vmul.f32 %v296, %v304
  %v322 = vmul.f32 %v295, %v308
  %v323 = vmul.f32 %v294, %v312
  %v324 = vmul.f32 %v297, %v316
  %v325 = vpack.c.bf16 %v321, %v321
  %v326 = vpack.c.bf16 %v322, %v322
  %v327 = vpack.c.bf16 %v323, %v323
  %v328 = vpack.c.bf16 %v324, %v324
  %v333 = vunpack.c.l.b16 %v325
  %v334 = vunpack.c.l.b16 %v326
  %v335 = vunpack.c.l.b16 %v327
  %v336 = vunpack.c.l.b16 %v328
  %v337 = vpack.c.b16 %v334, %v333
  %v338 = vpack.c.b16 %v336, %v335
  %341 = vst [vmem:[#allocation2 + $0x50] sm:$0xff] %v337
  %342 = vst [vmem:[#allocation2 + $0x58] sm:$0xff] %v338
  %343 = vrot.lane.b32.xlu0 %v30, 113
  %v344 = vpop.permute.xlu0 %343
  %345 = vrot.lane.b32.xlu0 %v31, 113
  %v346 = vpop.permute.xlu0 %345
  %347 = vrot.lane.b32.xlu0 %v32, 113
  %v348 = vpop.permute.xlu0 %347
  %349 = vrot.lane.b32.xlu0 %v33, 113
  %v350 = vpop.permute.xlu0 %349
  %vm351 = vcmp.lt.s32.totalorder %v43, 113
  %v352 = vsel %vm351, %v348, %v350
  %v353 = vsel %vm351, %v346, %v348
  %v354 = vsel %vm351, %v344, %v346
  %v355 = vsel %vm351, %v350, %v344
  %s356 = scalar_lea.vmem %s1, 5
  %v357 = vld [vmem:[%s356] ss:$8 sm:$0xf]
  %v359 = vlaneseq
  %v360 = vshrl.u32 %v359, 7
  %v361 = vsub.s32 0, %v360
  %v362 = vrot.slane %v357, %v361
  %v363 = vlaneseq
  %v364 = vshrl.u32 %v363, 7
  %v365 = vsub.s32 1, %v364
  %v366 = vrot.slane %v357, %v365
  %v367 = vlaneseq
  %v368 = vshrl.u32 %v367, 7
  %v369 = vsub.s32 2, %v368
  %v370 = vrot.slane %v357, %v369
  %v371 = vlaneseq
  %v372 = vshrl.u32 %v371, 7
  %v373 = vsub.s32 3, %v372
  %v374 = vrot.slane %v357, %v373
  %v379 = vmul.f32 %v354, %v362
  %v380 = vmul.f32 %v353, %v366
  %v381 = vmul.f32 %v352, %v370
  %v382 = vmul.f32 %v355, %v374
  %v383 = vpack.c.bf16 %v379, %v379
  %v384 = vpack.c.bf16 %v380, %v380
  %v385 = vpack.c.bf16 %v381, %v381
  %v386 = vpack.c.bf16 %v382, %v382
  %v391 = vunpack.c.l.b16 %v383
  %v392 = vunpack.c.l.b16 %v384
  %v393 = vunpack.c.l.b16 %v385
  %v394 = vunpack.c.l.b16 %v386
  %v395 = vpack.c.b16 %v392, %v391
  %v396 = vpack.c.b16 %v394, %v393
  %399 = vst [vmem:[#allocation2 + $0x60] sm:$0xff] %v395
  %400 = vst [vmem:[#allocation2 + $0x68] sm:$0xff] %v396
  %401 = vrot.lane.b32.xlu0 %v30, 112
  %v402 = vpop.permute.xlu0 %401
  %403 = vrot.lane.b32.xlu0 %v31, 112
  %v404 = vpop.permute.xlu0 %403
  %405 = vrot.lane.b32.xlu0 %v32, 112
  %v406 = vpop.permute.xlu0 %405
  %407 = vrot.lane.b32.xlu0 %v33, 112
  %v408 = vpop.permute.xlu0 %407
  %vm409 = vcmp.lt.s32.totalorder %v43, 112
  %v410 = vsel %vm409, %v406, %v408
  %v411 = vsel %vm409, %v404, %v406
  %v412 = vsel %vm409, %v402, %v404
  %v413 = vsel %vm409, %v408, %v402
  %s414 = scalar_lea.vmem %s1, 6
  %v415 = vld [vmem:[%s414] ss:$8 sm:$0xf]
  %v417 = vlaneseq
  %v418 = vshrl.u32 %v417, 7
  %v419 = vsub.s32 0, %v418
  %v420 = vrot.slane %v415, %v419
  %v421 = vlaneseq
  %v422 = vshrl.u32 %v421, 7
  %v423 = vsub.s32 1, %v422
  %v424 = vrot.slane %v415, %v423
  %v425 = vlaneseq
  %v426 = vshrl.u32 %v425, 7
  %v427 = vsub.s32 2, %v426
  %v428 = vrot.slane %v415, %v427
  %v429 = vlaneseq
  %v430 = vshrl.u32 %v429, 7
  %v431 = vsub.s32 3, %v430
  %v432 = vrot.slane %v415, %v431
  %v437 = vmul.f32 %v412, %v420
  %v438 = vmul.f32 %v411, %v424
  %v439 = vmul.f32 %v410, %v428
  %v440 = vmul.f32 %v413, %v432
  %v441 = vpack.c.bf16 %v437, %v437
  %v442 = vpack.c.bf16 %v438, %v438
  %v443 = vpack.c.bf16 %v439, %v439
  %v444 = vpack.c.bf16 %v440, %v440
  %v449 = vunpack.c.l.b16 %v441
  %v450 = vunpack.c.l.b16 %v442
  %v451 = vunpack.c.l.b16 %v443
  %v452 = vunpack.c.l.b16 %v444
  %v453 = vpack.c.b16 %v450, %v449
  %v454 = vpack.c.b16 %v452, %v451
  %457 = vst [vmem:[#allocation2 + $0x70] sm:$0xff] %v453
  %458 = vst [vmem:[#allocation2 + $0x78] sm:$0xff] %v454
  %459 = vrot.lane.b32.xlu0 %v30, 111
  %v460 = vpop.permute.xlu0 %459
  %461 = vrot.lane.b32.xlu0 %v31, 111
  %v462 = vpop.permute.xlu0 %461
  %463 = vrot.lane.b32.xlu0 %v32, 111
  %v464 = vpop.permute.xlu0 %463
  %465 = vrot.lane.b32.xlu0 %v33, 111
  %v466 = vpop.permute.xlu0 %465
  %vm467 = vcmp.lt.s32.totalorder %v43, 111
  %v468 = vsel %vm467, %v464, %v466
  %v469 = vsel %vm467, %v462, %v464
  %v470 = vsel %vm467, %v460, %v462
  %v471 = vsel %vm467, %v466, %v460
  %s472 = scalar_lea.vmem %s1, 7
  %v473 = vld [vmem:[%s472] ss:$8 sm:$0xf]
  %v475 = vlaneseq
  %v476 = vshrl.u32 %v475, 7
  %v477 = vsub.s32 0, %v476
  %v478 = vrot.slane %v473, %v477
  %v479 = vlaneseq
  %v480 = vshrl.u32 %v479, 7
  %v481 = vsub.s32 1, %v480
  %v482 = vrot.slane %v473, %v481
  %v483 = vlaneseq
  %v484 = vshrl.u32 %v483, 7
  %v485 = vsub.s32 2, %v484
  %v486 = vrot.slane %v473, %v485
  %v487 = vlaneseq
  %v488 = vshrl.u32 %v487, 7
  %v489 = vsub.s32 3, %v488
  %v490 = vrot.slane %v473, %v489
  %v495 = vmul.f32 %v470, %v478
  %v496 = vmul.f32 %v469, %v482
  %v497 = vmul.f32 %v468, %v486
  %v498 = vmul.f32 %v471, %v490
  %v499 = vpack.c.bf16 %v495, %v495
  %v500 = vpack.c.bf16 %v496, %v496
  %v501 = vpack.c.bf16 %v497, %v497
  %v502 = vpack.c.bf16 %v498, %v498
  %v507 = vunpack.c.l.b16 %v499
  %v508 = vunpack.c.l.b16 %v500
  %v509 = vunpack.c.l.b16 %v501
  %v510 = vunpack.c.l.b16 %v502
  %v511 = vpack.c.b16 %v508, %v507
  %v512 = vpack.c.b16 %v510, %v509
  %515 = vst [vmem:[#allocation2 + $0x80] sm:$0xff] %v511
  %516 = vst [vmem:[#allocation2 + $0x88] sm:$0xff] %v512
  %v517 = vld [vmem:[%s2] sm:$0xf]
  %v518 = vld [vmem:[#allocation2] sm:$0xff]
  %v519 = vld [vmem:[#allocation2 + $0x8] sm:$0xff]
  %v520 = vld [vmem:[#allocation2 + $0x10] sm:$0xff]
  %v521 = vld [vmem:[#allocation2 + $0x18] sm:$0xff]
  %v522 = vld [vmem:[#allocation2 + $0x20] sm:$0xff]
  %v523 = vld [vmem:[#allocation2 + $0x28] sm:$0xff]
  %v524 = vld [vmem:[#allocation2 + $0x30] sm:$0xff]
  %v525 = vld [vmem:[#allocation2 + $0x38] sm:$0xff]
  %v526 = vld [vmem:[#allocation2 + $0x40] sm:$0xff]
  %v527 = vld [vmem:[#allocation2 + $0x48] sm:$0xff]
  %v528 = vld [vmem:[#allocation2 + $0x50] sm:$0xff]
  %v529 = vld [vmem:[#allocation2 + $0x58] sm:$0xff]
  %v530 = vld [vmem:[#allocation2 + $0x60] sm:$0xff]
  %v531 = vld [vmem:[#allocation2 + $0x68] sm:$0xff]
  %v532 = vld [vmem:[#allocation2 + $0x70] sm:$0xff]
  %v533 = vld [vmem:[#allocation2 + $0x78] sm:$0xff]
  %v534 = vld [vmem:[#allocation2 + $0x80] sm:$0xff]
  %v535 = vld [vmem:[#allocation2 + $0x88] sm:$0xff]
  %v554 = vunpack.c.l.b16 %v518
  %v555 = vunpack.c.h.b16 %v518
  %v556 = vunpack.c.l.b16 %v519
  %v557 = vunpack.c.h.b16 %v519
  %v558 = vunpack.c.l.b16 %v520
  %v559 = vunpack.c.h.b16 %v520
  %v560 = vunpack.c.l.b16 %v521
  %v561 = vunpack.c.h.b16 %v521
  %v562 = vunpack.c.l.b16 %v522
  %v563 = vunpack.c.h.b16 %v522
  %v564 = vunpack.c.l.b16 %v523
  %v565 = vunpack.c.h.b16 %v523
  %v566 = vunpack.c.l.b16 %v524
  %v567 = vunpack.c.h.b16 %v524
  %v568 = vunpack.c.l.b16 %v525
  %v569 = vunpack.c.h.b16 %v525
  %v570 = vunpack.c.l.b16 %v526
  %v571 = vunpack.c.h.b16 %v526
  %v572 = vunpack.c.l.b16 %v527
  %v573 = vunpack.c.h.b16 %v527
  %v574 = vunpack.c.l.b16 %v528
  %v575 = vunpack.c.h.b16 %v528
  %v576 = vunpack.c.l.b16 %v529
  %v577 = vunpack.c.h.b16 %v529
  %v578 = vunpack.c.l.b16 %v530
  %v579 = vunpack.c.h.b16 %v530
  %v580 = vunpack.c.l.b16 %v531
  %v581 = vunpack.c.h.b16 %v531
  %v582 = vunpack.c.l.b16 %v532
  %v583 = vunpack.c.h.b16 %v532
  %v584 = vunpack.c.l.b16 %v533
  %v585 = vunpack.c.h.b16 %v533
  %v586 = vunpack.c.l.b16 %v534
  %v587 = vunpack.c.h.b16 %v534
  %v588 = vunpack.c.l.b16 %v535
  %v589 = vunpack.c.h.b16 %v535
  %v590 = vpack.c.b16 %v558, %v554
  %v591 = vpack.c.b16 %v559, %v555
  %v592 = vpack.c.b16 %v560, %v556
  %v593 = vpack.c.b16 %v561, %v557
  %v594 = vpack.c.b16 %v566, %v562
  %v595 = vpack.c.b16 %v567, %v563
  %v596 = vpack.c.b16 %v568, %v564
  %v597 = vpack.c.b16 %v569, %v565
  %v598 = vpack.c.b16 %v574, %v570
  %v599 = vpack.c.b16 %v575, %v571
  %v600 = vpack.c.b16 %v576, %v572
  %v601 = vpack.c.b16 %v577, %v573
  %v602 = vpack.c.b16 %v582, %v578
  %v603 = vpack.c.b16 %v583, %v579
  %v604 = vpack.c.b16 %v584, %v580
  %v605 = vpack.c.b16 %v585, %v581
  %v606 = vpack.c.b16 %v586, %v586
  %v607 = vpack.c.b16 %v587, %v587
  %v608 = vpack.c.b16 %v588, %v588
  %v609 = vpack.c.b16 %v589, %v589
  %vm626 = vcmask 588800
  %v628 = vsel %vm626, %v517, 0
  %vm630 = vcmask 1043456
  %v632 = vsel %vm630, %v606, 0
  %v635 = vsel %vm630, %v607, 0
  %v638 = vsel %vm630, %v608, 0
  %v641 = vsel %vm630, %v609, 0
  %643 = vmatprep.subr.bf16.mxu0 %v591
  %644 = vmatpush1.bf16.msra.mxu0 %v590
  %645 = vmatprep.subr.bf16.mxu0 %v595
  %646 = vmatpush1.bf16.msra.mxu0 %v594
  %647 = vmatprep.subr.bf16.mxu0 %v599
  %648 = vmatpush1.bf16.msra.mxu0 %v598
  %649 = vmatprep.subr.bf16.mxu0 %v603
  %650 = vmatpush1.bf16.msra.mxu0 %v602
  %651 = vmatprep.subr.bf16.mxu0 %v635
  %652 = vmatpush1.bf16.msra.mxu0 %v632
  %653 = vmatprep.subr.bf16.mxu0 0
  %654 = vmatpush1.bf16.msra.mxu0 0
  %655 = vmatprep.subr.bf16.mxu0 0
  %656 = vmatpush1.bf16.msra.mxu0 0
  %657 = vmatprep.subr.bf16.mxu0 0
  %658 = vmatpush1.bf16.msra.mxu0 0
  %659 = vmatprep.subr.bf16.mxu0 0
  %660 = vmatpush1.bf16.msra.mxu0 0
  %661 = vmatprep.subr.bf16.mxu0 0
  %662 = vmatpush1.bf16.msra.mxu0 0
  %663 = vmatprep.subr.bf16.mxu0 0
  %664 = vmatpush1.bf16.msra.mxu0 0
  %665 = vmatprep.subr.bf16.mxu0 0
  %666 = vmatpush1.bf16.msra.mxu0 0
  %667 = vmatprep.subr.bf16.mxu0 0
  %668 = vmatpush1.bf16.msra.mxu0 0
  %669 = vmatprep.subr.bf16.mxu0 0
  %670 = vmatpush1.bf16.msra.mxu0 0
  %671 = vmatprep.subr.bf16.mxu0 0
  %672 = vmatpush1.bf16.msra.mxu0 0
  %673 = vmatprep.subr.bf16.mxu0 0
  %674 = vmatpush1.bf16.msra.mxu0 0
  %675 = vmatprep.mubr.bf16.mxu0 0
  %676 = vmatmul.mubr.bf16.gmra.mrb[0].mxu0 %v628
  %v677 = vpop.f32.mrb[0].mxu0
  %v678 = vadd.f32 0.0, %v677
  %v679 = vpop.f32.mrb[0].mxu0
  %v680 = vadd.f32 0.0, %v679
  %v681 = vpop.f32.mrb[0].mxu0
  %v682 = vpop.f32.mrb[0].mxu0
  %683 = vdwg.mxu0
  %684 = vmatprep.subr.bf16.mxu0 %v593
  %685 = vmatpush1.bf16.msra.mxu0 %v592
  %686 = vmatprep.subr.bf16.mxu0 %v597
  %687 = vmatpush1.bf16.msra.mxu0 %v596
  %688 = vmatprep.subr.bf16.mxu0 %v601
  %689 = vmatpush1.bf16.msra.mxu0 %v600
  %690 = vmatprep.subr.bf16.mxu0 %v605
  %691 = vmatpush1.bf16.msra.mxu0 %v604
  %692 = vmatprep.subr.bf16.mxu0 %v641
  %693 = vmatpush1.bf16.msra.mxu0 %v638
  %694 = vmatprep.subr.bf16.mxu0 0
  %695 = vmatpush1.bf16.msra.mxu0 0
  %696 = vmatprep.subr.bf16.mxu0 0
  %697 = vmatpush1.bf16.msra.mxu0 0
  %698 = vmatprep.subr.bf16.mxu0 0
  %699 = vmatpush1.bf16.msra.mxu0 0
  %700 = vmatprep.subr.bf16.mxu0 0
  %701 = vmatpush1.bf16.msra.mxu0 0
  %702 = vmatprep.subr.bf16.mxu0 0
  %703 = vmatpush1.bf16.msra.mxu0 0
  %704 = vmatprep.subr.bf16.mxu0 0
  %705 = vmatpush1.bf16.msra.mxu0 0
  %706 = vmatprep.subr.bf16.mxu0 0
  %707 = vmatpush1.bf16.msra.mxu0 0
  %708 = vmatprep.subr.bf16.mxu0 0
  %709 = vmatpush1.bf16.msra.mxu0 0
  %710 = vmatprep.subr.bf16.mxu0 0
  %711 = vmatpush1.bf16.msra.mxu0 0
  %712 = vmatprep.subr.bf16.mxu0 0
  %713 = vmatpush1.bf16.msra.mxu0 0
  %714 = vmatprep.subr.bf16.mxu0 0
  %715 = vmatpush1.bf16.msra.mxu0 0
  %716 = vmatprep.mubr.bf16.mxu0 0
  %717 = vmatmul.mubr.bf16.gmra.mrb[0].mxu0 %v628
  %v718 = vpop.f32.mrb[0].mxu0
  %v719 = vadd.f32 0.0, %v718
  %v720 = vpop.f32.mrb[0].mxu0
  %v721 = vadd.f32 0.0, %v720
  %v722 = vpop.f32.mrb[0].mxu0
  %v723 = vpop.f32.mrb[0].mxu0
  %724 = vdwg.mxu0
  %v725 = vadd.f32 %v678, %v680
  %v726 = vadd.f32 %v725, %v719
  %v727 = vadd.f32 %v726, %v721
  %728 = vadd.xlane.f32.xlu0 %v727
  %v729 = vpop.xlane.xlu0 %728
  %v730 = vrcp.pop 512.0
  %v731 = vmul.f32 %v729, %v730
  %v732 = vsub.f32 %v678, %v731
  %v733 = vsub.f32 %v680, %v731
  %v734 = vsub.f32 %v719, %v731
  %v735 = vsub.f32 %v721, %v731
  %v736 = vmul.f32 %v732, %v732
  %v737 = vmul.f32 %v733, %v733
  %v738 = vmul.f32 %v734, %v734
  %v739 = vmul.f32 %v735, %v735
  %v740 = vadd.f32 %v736, %v737
  %v741 = vadd.f32 %v740, %v738
  %v742 = vadd.f32 %v741, %v739
  %743 = vadd.xlane.f32.xlu0 %v742
  %v744 = vpop.xlane.xlu0 %743
  %v745 = vmul.f32 %v744, %v730
  %v746 = vld [vmem:[%s3] sm:$0xff]
  %v747 = vadd.f32 %v745, 1e-05
  %v748 = vrsqrt.pop %v747
  %v749 = vmul.f32 %v746, %v748
  %751 = vset.pattern.permute.xlu0 0
  %752 = vperm.xlu0 %751, %v749
  %v753 = vpop.permute.xlu0 %752
  %v755 = vmul.f32 %v732, %v753
  %v756 = vmul.f32 %v733, %v753
  %v757 = vmul.f32 %v734, %v753
  %v758 = vmul.f32 %v735, %v753
  %v759 = vld [vmem:[%s4] sm:$0xff]
  %761 = vset.pattern.permute.xlu0 0
  %762 = vperm.xlu0 %761, %v759
  %v763 = vpop.permute.xlu0 %762
  %v765 = vadd.f32 %v755, %v763
  %v766 = vadd.f32 %v756, %v763
  %v767 = vadd.f32 %v757, %v763
  %v768 = vadd.f32 %v758, %v763
  %v769 = vmax.f32 %v765, 0.0
  %v770 = vmax.f32 %v766, 0.0
  %v771 = vmax.f32 %v767, 0.0
  %v772 = vmax.f32 %v768, 0.0
  %773 = vrot.lane.b32.xlu0 %v769, 17
  %v774 = vpop.permute.xlu0 %773
  %775 = vrot.lane.b32.xlu0 %v770, 17
  %v776 = vpop.permute.xlu0 %775
  %777 = vrot.lane.b32.xlu0 %v771, 17
  %v778 = vpop.permute.xlu0 %777
  %779 = vrot.lane.b32.xlu0 %v772, 17
  %v780 = vpop.permute.xlu0 %779
  %v781 = vsel %vm44, %v778, %v780
  %v782 = vsel %vm44, %v776, %v778
  %v783 = vsel %vm44, %v774, %v776
  %v784 = vsel %vm44, %v780, %v774
  %v785 = vld [vmem:[%s1] ss:$8 sm:$0xf]
  %v787 = vlaneseq
  %v788 = vshrl.u32 %v787, 7
  %v789 = vsub.s32 0, %v788
  %v790 = vrot.slane %v785, %v789
  %v791 = vlaneseq
  %v792 = vshrl.u32 %v791, 7
  %v793 = vsub.s32 1, %v792
  %v794 = vrot.slane %v785, %v793
  %v795 = vlaneseq
  %v796 = vshrl.u32 %v795, 7
  %v797 = vsub.s32 2, %v796
  %v798 = vrot.slane %v785, %v797
  %v799 = vlaneseq
  %v800 = vshrl.u32 %v799, 7
  %v801 = vsub.s32 3, %v800
  %v802 = vrot.slane %v785, %v801
  %v807 = vmul.f32 %v784, %v790
  %v808 = vmul.f32 %v783, %v794
  %v809 = vmul.f32 %v782, %v798
  %v810 = vmul.f32 %v781, %v802
  %v811 = vpack.c.bf16 %v807, %v807
  %v812 = vpack.c.bf16 %v808, %v808
  %v813 = vpack.c.bf16 %v809, %v809
  %v814 = vpack.c.bf16 %v810, %v810
  %v819 = vunpack.c.l.b16 %v811
  %v820 = vunpack.c.l.b16 %v812
  %v821 = vunpack.c.l.b16 %v813
  %v822 = vunpack.c.l.b16 %v814
  %v823 = vpack.c.b16 %v820, %v819
  %v824 = vpack.c.b16 %v822, %v821
  %827 = vst [vmem:[#allocation2] sm:$0xff] %v823
  %828 = vst [vmem:[#allocation2 + $0x8] sm:$0xff] %v824
  %829 = vrot.lane.b32.xlu0 %v769, 16
  %v830 = vpop.permute.xlu0 %829
  %831 = vrot.lane.b32.xlu0 %v770, 16
  %v832 = vpop.permute.xlu0 %831
  %833 = vrot.lane.b32.xlu0 %v771, 16
  %v834 = vpop.permute.xlu0 %833
  %835 = vrot.lane.b32.xlu0 %v772, 16
  %v836 = vpop.permute.xlu0 %835
  %v837 = vsel %vm101, %v834, %v836
  %v838 = vsel %vm101, %v832, %v834
  %v839 = vsel %vm101, %v830, %v832
  %v840 = vsel %vm101, %v836, %v830
  %v841 = vld [vmem:[%s106] ss:$8 sm:$0xf]
  %v843 = vlaneseq
  %v844 = vshrl.u32 %v843, 7
  %v845 = vsub.s32 0, %v844
  %v846 = vrot.slane %v841, %v845
  %v847 = vlaneseq
  %v848 = vshrl.u32 %v847, 7
  %v849 = vsub.s32 1, %v848
  %v850 = vrot.slane %v841, %v849
  %v851 = vlaneseq
  %v852 = vshrl.u32 %v851, 7
  %v853 = vsub.s32 2, %v852
  %v854 = vrot.slane %v841, %v853
  %v855 = vlaneseq
  %v856 = vshrl.u32 %v855, 7
  %v857 = vsub.s32 3, %v856
  %v858 = vrot.slane %v841, %v857
  %v863 = vmul.f32 %v840, %v846
  %v864 = vmul.f32 %v839, %v850
  %v865 = vmul.f32 %v838, %v854
  %v866 = vmul.f32 %v837, %v858
  %v867 = vpack.c.bf16 %v863, %v863
  %v868 = vpack.c.bf16 %v864, %v864
  %v869 = vpack.c.bf16 %v865, %v865
  %v870 = vpack.c.bf16 %v866, %v866
  %v875 = vunpack.c.l.b16 %v867
  %v876 = vunpack.c.l.b16 %v868
  %v877 = vunpack.c.l.b16 %v869
  %v878 = vunpack.c.l.b16 %v870
  %v879 = vpack.c.b16 %v876, %v875
  %v880 = vpack.c.b16 %v878, %v877
  %883 = vst [vmem:[#allocation2 + $0x10] sm:$0xff] %v879
  %884 = vst [vmem:[#allocation2 + $0x18] sm:$0xff] %v880
  %885 = vrot.lane.b32.xlu0 %v769, 15
  %v886 = vpop.permute.xlu0 %885
  %887 = vrot.lane.b32.xlu0 %v770, 15
  %v888 = vpop.permute.xlu0 %887
  %889 = vrot.lane.b32.xlu0 %v771, 15
  %v890 = vpop.permute.xlu0 %889
  %891 = vrot.lane.b32.xlu0 %v772, 15
  %v892 = vpop.permute.xlu0 %891
  %v893 = vsel %vm159, %v890, %v892
  %v894 = vsel %vm159, %v888, %v890
  %v895 = vsel %vm159, %v886, %v888
  %v896 = vsel %vm159, %v892, %v886
  %v897 = vld [vmem:[%s164] ss:$8 sm:$0xf]
  %v899 = vlaneseq
  %v900 = vshrl.u32 %v899, 7
  %v901 = vsub.s32 0, %v900
  %v902 = vrot.slane %v897, %v901
  %v903 = vlaneseq
  %v904 = vshrl.u32 %v903, 7
  %v905 = vsub.s32 1, %v904
  %v906 = vrot.slane %v897, %v905
  %v907 = vlaneseq
  %v908 = vshrl.u32 %v907, 7
  %v909 = vsub.s32 2, %v908
  %v910 = vrot.slane %v897, %v909
  %v911 = vlaneseq
  %v912 = vshrl.u32 %v911, 7
  %v913 = vsub.s32 3, %v912
  %v914 = vrot.slane %v897, %v913
  %v919 = vmul.f32 %v896, %v902
  %v920 = vmul.f32 %v895, %v906
  %v921 = vmul.f32 %v894, %v910
  %v922 = vmul.f32 %v893, %v914
  %v923 = vpack.c.bf16 %v919, %v919
  %v924 = vpack.c.bf16 %v920, %v920
  %v925 = vpack.c.bf16 %v921, %v921
  %v926 = vpack.c.bf16 %v922, %v922
  %v931 = vunpack.c.l.b16 %v923
  %v932 = vunpack.c.l.b16 %v924
  %v933 = vunpack.c.l.b16 %v925
  %v934 = vunpack.c.l.b16 %v926
  %v935 = vpack.c.b16 %v932, %v931
  %v936 = vpack.c.b16 %v934, %v933
  %939 = vst [vmem:[#allocation2 + $0x20] sm:$0xff] %v935
  %940 = vst [vmem:[#allocation2 + $0x28] sm:$0xff] %v936
  %941 = vrot.lane.b32.xlu0 %v769, 1
  %v942 = vpop.permute.xlu0 %941
  %943 = vrot.lane.b32.xlu0 %v770, 1
  %v944 = vpop.permute.xlu0 %943
  %945 = vrot.lane.b32.xlu0 %v771, 1
  %v946 = vpop.permute.xlu0 %945
  %947 = vrot.lane.b32.xlu0 %v772, 1
  %v948 = vpop.permute.xlu0 %947
  %v949 = vsel %vm217, %v946, %v948
  %v950 = vsel %vm217, %v944, %v946
  %v951 = vsel %vm217, %v942, %v944
  %v952 = vsel %vm217, %v948, %v942
  %v953 = vld [vmem:[%s222] ss:$8 sm:$0xf]
  %v955 = vlaneseq
  %v956 = vshrl.u32 %v955, 7
  %v957 = vsub.s32 0, %v956
  %v958 = vrot.slane %v953, %v957
  %v959 = vlaneseq
  %v960 = vshrl.u32 %v959, 7
  %v961 = vsub.s32 1, %v960
  %v962 = vrot.slane %v953, %v961
  %v963 = vlaneseq
  %v964 = vshrl.u32 %v963, 7
  %v965 = vsub.s32 2, %v964
  %v966 = vrot.slane %v953, %v965
  %v967 = vlaneseq
  %v968 = vshrl.u32 %v967, 7
  %v969 = vsub.s32 3, %v968
  %v970 = vrot.slane %v953, %v969
  %v975 = vmul.f32 %v952, %v958
  %v976 = vmul.f32 %v951, %v962
  %v977 = vmul.f32 %v950, %v966
  %v978 = vmul.f32 %v949, %v970
  %v979 = vpack.c.bf16 %v975, %v975
  %v980 = vpack.c.bf16 %v976, %v976
  %v981 = vpack.c.bf16 %v977, %v977
  %v982 = vpack.c.bf16 %v978, %v978
  %v987 = vunpack.c.l.b16 %v979
  %v988 = vunpack.c.l.b16 %v980
  %v989 = vunpack.c.l.b16 %v981
  %v990 = vunpack.c.l.b16 %v982
  %v991 = vpack.c.b16 %v988, %v987
  %v992 = vpack.c.b16 %v990, %v989
  %995 = vst [vmem:[#allocation2 + $0x30] sm:$0xff] %v991
  %996 = vst [vmem:[#allocation2 + $0x38] sm:$0xff] %v992
  %v997 = vpack.c.bf16 %v769, %v769
  %v998 = vpack.c.bf16 %v770, %v770
  %v999 = vpack.c.bf16 %v771, %v771
  %v1000 = vpack.c.bf16 %v772, %v772
  %v1005 = vunpack.c.l.b16 %v997
  %v1006 = vunpack.c.l.b16 %v998
  %v1007 = vunpack.c.l.b16 %v999
  %v1008 = vunpack.c.l.b16 %v1000
  %v1009 = vpack.c.b16 %v1006, %v1005
  %v1010 = vpack.c.b16 %v1008, %v1007
  %1013 = vst [vmem:[#allocation2 + $0x40] sm:$0xff] %v1009
  %1014 = vst [vmem:[#allocation2 + $0x48] sm:$0xff] %v1010
  %1015 = vrot.lane.b32.xlu0 %v769, 127
  %v1016 = vpop.permute.xlu0 %1015
  %1017 = vrot.lane.b32.xlu0 %v770, 127
  %v1018 = vpop.permute.xlu0 %1017
  %1019 = vrot.lane.b32.xlu0 %v771, 127
  %v1020 = vpop.permute.xlu0 %1019
  %1021 = vrot.lane.b32.xlu0 %v772, 127
  %v1022 = vpop.permute.xlu0 %1021
  %v1023 = vsel %vm293, %v1020, %v1022
  %v1024 = vsel %vm293, %v1018, %v1020
  %v1025 = vsel %vm293, %v1016, %v1018
  %v1026 = vsel %vm293, %v1022, %v1016
  %v1027 = vld [vmem:[%s298] ss:$8 sm:$0xf]
  %v1029 = vlaneseq
  %v1030 = vshrl.u32 %v1029, 7
  %v1031 = vsub.s32 0, %v1030
  %v1032 = vrot.slane %v1027, %v1031
  %v1033 = vlaneseq
  %v1034 = vshrl.u32 %v1033, 7
  %v1035 = vsub.s32 1, %v1034
  %v1036 = vrot.slane %v1027, %v1035
  %v1037 = vlaneseq
  %v1038 = vshrl.u32 %v1037, 7
  %v1039 = vsub.s32 2, %v1038
  %v1040 = vrot.slane %v1027, %v1039
  %v1041 = vlaneseq
  %v1042 = vshrl.u32 %v1041, 7
  %v1043 = vsub.s32 3, %v1042
  %v1044 = vrot.slane %v1027, %v1043
  %v1049 = vmul.f32 %v1025, %v1032
  %v1050 = vmul.f32 %v1024, %v1036
  %v1051 = vmul.f32 %v1023, %v1040
  %v1052 = vmul.f32 %v1026, %v1044
  %v1053 = vpack.c.bf16 %v1049, %v1049
  %v1054 = vpack.c.bf16 %v1050, %v1050
  %v1055 = vpack.c.bf16 %v1051, %v1051
  %v1056 = vpack.c.bf16 %v1052, %v1052
  %v1061 = vunpack.c.l.b16 %v1053
  %v1062 = vunpack.c.l.b16 %v1054
  %v1063 = vunpack.c.l.b16 %v1055
  %v1064 = vunpack.c.l.b16 %v1056
  %v1065 = vpack.c.b16 %v1062, %v1061
  %v1066 = vpack.c.b16 %v1064, %v1063
  %1069 = vst [vmem:[#allocation2 + $0x50] sm:$0xff] %v1065
  %1070 = vst [vmem:[#allocation2 + $0x58] sm:$0xff] %v1066
  %1071 = vrot.lane.b32.xlu0 %v769, 113
  %v1072 = vpop.permute.xlu0 %1071
  %1073 = vrot.lane.b32.xlu0 %v770, 113
  %v1074 = vpop.permute.xlu0 %1073
  %1075 = vrot.lane.b32.xlu0 %v771, 113
  %v1076 = vpop.permute.xlu0 %1075
  %1077 = vrot.lane.b32.xlu0 %v772, 113
  %v1078 = vpop.permute.xlu0 %1077
  %v1079 = vsel %vm351, %v1076, %v1078
  %v1080 = vsel %vm351, %v1074, %v1076
  %v1081 = vsel %vm351, %v1072, %v1074
  %v1082 = vsel %vm351, %v1078, %v1072
  %v1083 = vld [vmem:[%s356] ss:$8 sm:$0xf]
  %v1085 = vlaneseq
  %v1086 = vshrl.u32 %v1085, 7
  %v1087 = vsub.s32 0, %v1086
  %v1088 = vrot.slane %v1083, %v1087
  %v1089 = vlaneseq
  %v1090 = vshrl.u32 %v1089, 7
  %v1091 = vsub.s32 1, %v1090
  %v1092 = vrot.slane %v1083, %v1091
  %v1093 = vlaneseq
  %v1094 = vshrl.u32 %v1093, 7
  %v1095 = vsub.s32 2, %v1094
  %v1096 = vrot.slane %v1083, %v1095
  %v1097 = vlaneseq
  %v1098 = vshrl.u32 %v1097, 7
  %v1099 = vsub.s32 3, %v1098
  %v1100 = vrot.slane %v1083, %v1099
  %v1105 = vmul.f32 %v1081, %v1088
  %v1106 = vmul.f32 %v1080, %v1092
  %v1107 = vmul.f32 %v1079, %v1096
  %v1108 = vmul.f32 %v1082, %v1100
  %v1109 = vpack.c.bf16 %v1105, %v1105
  %v1110 = vpack.c.bf16 %v1106, %v1106
  %v1111 = vpack.c.bf16 %v1107, %v1107
  %v1112 = vpack.c.bf16 %v1108, %v1108
  %v1117 = vunpack.c.l.b16 %v1109
  %v1118 = vunpack.c.l.b16 %v1110
  %v1119 = vunpack.c.l.b16 %v1111
  %v1120 = vunpack.c.l.b16 %v1112
  %v1121 = vpack.c.b16 %v1118, %v1117
  %v1122 = vpack.c.b16 %v1120, %v1119
  %1125 = vst [vmem:[#allocation2 + $0x60] sm:$0xff] %v1121
  %1126 = vst [vmem:[#allocation2 + $0x68] sm:$0xff] %v1122
  %1127 = vrot.lane.b32.xlu0 %v769, 112
  %v1128 = vpop.permute.xlu0 %1127
  %1129 = vrot.lane.b32.xlu0 %v770, 112
  %v1130 = vpop.permute.xlu0 %1129
  %1131 = vrot.lane.b32.xlu0 %v771, 112
  %v1132 = vpop.permute.xlu0 %1131
  %1133 = vrot.lane.b32.xlu0 %v772, 112
  %v1134 = vpop.permute.xlu0 %1133
  %v1135 = vsel %vm409, %v1132, %v1134
  %v1136 = vsel %vm409, %v1130, %v1132
  %v1137 = vsel %vm409, %v1128, %v1130
  %v1138 = vsel %vm409, %v1134, %v1128
  %v1139 = vld [vmem:[%s414] ss:$8 sm:$0xf]
  %v1141 = vlaneseq
  %v1142 = vshrl.u32 %v1141, 7
  %v1143 = vsub.s32 0, %v1142
  %v1144 = vrot.slane %v1139, %v1143
  %v1145 = vlaneseq
  %v1146 = vshrl.u32 %v1145, 7
  %v1147 = vsub.s32 1, %v1146
  %v1148 = vrot.slane %v1139, %v1147
  %v1149 = vlaneseq
  %v1150 = vshrl.u32 %v1149, 7
  %v1151 = vsub.s32 2, %v1150
  %v1152 = vrot.slane %v1139, %v1151
  %v1153 = vlaneseq
  %v1154 = vshrl.u32 %v1153, 7
  %v1155 = vsub.s32 3, %v1154
  %v1156 = vrot.slane %v1139, %v1155
  %v1161 = vmul.f32 %v1137, %v1144
  %v1162 = vmul.f32 %v1136, %v1148
  %v1163 = vmul.f32 %v1135, %v1152
  %v1164 = vmul.f32 %v1138, %v1156
  %v1165 = vpack.c.bf16 %v1161, %v1161
  %v1166 = vpack.c.bf16 %v1162, %v1162
  %v1167 = vpack.c.bf16 %v1163, %v1163
  %v1168 = vpack.c.bf16 %v1164, %v1164
  %v1173 = vunpack.c.l.b16 %v1165
  %v1174 = vunpack.c.l.b16 %v1166
  %v1175 = vunpack.c.l.b16 %v1167
  %v1176 = vunpack.c.l.b16 %v1168
  %v1177 = vpack.c.b16 %v1174, %v1173
  %v1178 = vpack.c.b16 %v1176, %v1175
  %1181 = vst [vmem:[#allocation2 + $0x70] sm:$0xff] %v1177
  %1182 = vst [vmem:[#allocation2 + $0x78] sm:$0xff] %v1178
  %1183 = vrot.lane.b32.xlu0 %v769, 111
  %v1184 = vpop.permute.xlu0 %1183
  %1185 = vrot.lane.b32.xlu0 %v770, 111
  %v1186 = vpop.permute.xlu0 %1185
  %1187 = vrot.lane.b32.xlu0 %v771, 111
  %v1188 = vpop.permute.xlu0 %1187
  %1189 = vrot.lane.b32.xlu0 %v772, 111
  %v1190 = vpop.permute.xlu0 %1189
  %v1191 = vsel %vm467, %v1188, %v1190
  %v1192 = vsel %vm467, %v1186, %v1188
  %v1193 = vsel %vm467, %v1184, %v1186
  %v1194 = vsel %vm467, %v1190, %v1184
  %v1195 = vld [vmem:[%s472] ss:$8 sm:$0xf]
  %v1197 = vlaneseq
  %v1198 = vshrl.u32 %v1197, 7
  %v1199 = vsub.s32 0, %v1198
  %v1200 = vrot.slane %v1195, %v1199
  %v1201 = vlaneseq
  %v1202 = vshrl.u32 %v1201, 7
  %v1203 = vsub.s32 1, %v1202
  %v1204 = vrot.slane %v1195, %v1203
  %v1205 = vlaneseq
  %v1206 = vshrl.u32 %v1205, 7
  %v1207 = vsub.s32 2, %v1206
  %v1208 = vrot.slane %v1195, %v1207
  %v1209 = vlaneseq
  %v1210 = vshrl.u32 %v1209, 7
  %v1211 = vsub.s32 3, %v1210
  %v1212 = vrot.slane %v1195, %v1211
  %v1217 = vmul.f32 %v1193, %v1200
  %v1218 = vmul.f32 %v1192, %v1204
  %v1219 = vmul.f32 %v1191, %v1208
  %v1220 = vmul.f32 %v1194, %v1212
  %v1221 = vpack.c.bf16 %v1217, %v1217
  %v1222 = vpack.c.bf16 %v1218, %v1218
  %v1223 = vpack.c.bf16 %v1219, %v1219
  %v1224 = vpack.c.bf16 %v1220, %v1220
  %v1229 = vunpack.c.l.b16 %v1221
  %v1230 = vunpack.c.l.b16 %v1222
  %v1231 = vunpack.c.l.b16 %v1223
  %v1232 = vunpack.c.l.b16 %v1224
  %v1233 = vpack.c.b16 %v1230, %v1229
  %v1234 = vpack.c.b16 %v1232, %v1231
  %1237 = vst [vmem:[#allocation2 + $0x80] sm:$0xff] %v1233
  %1238 = vst [vmem:[#allocation2 + $0x88] sm:$0xff] %v1234
  %v1239 = vld [vmem:[%s5] sm:$0xf]
  %v1240 = vld [vmem:[#allocation2] sm:$0xff]
  %v1241 = vld [vmem:[#allocation2 + $0x8] sm:$0xff]
  %v1242 = vld [vmem:[#allocation2 + $0x10] sm:$0xff]
  %v1243 = vld [vmem:[#allocation2 + $0x18] sm:$0xff]
  %v1244 = vld [vmem:[#allocation2 + $0x20] sm:$0xff]
  %v1245 = vld [vmem:[#allocation2 + $0x28] sm:$0xff]
  %v1246 = vld [vmem:[#allocation2 + $0x30] sm:$0xff]
  %v1247 = vld [vmem:[#allocation2 + $0x38] sm:$0xff]
  %v1248 = vld [vmem:[#allocation2 + $0x40] sm:$0xff]
  %v1249 = vld [vmem:[#allocation2 + $0x48] sm:$0xff]
  %v1250 = vld [vmem:[#allocation2 + $0x50] sm:$0xff]
  %v1251 = vld [vmem:[#allocation2 + $0x58] sm:$0xff]
  %v1252 = vld [vmem:[#allocation2 + $0x60] sm:$0xff]
  %v1253 = vld [vmem:[#allocation2 + $0x68] sm:$0xff]
  %v1254 = vld [vmem:[#allocation2 + $0x70] sm:$0xff]
  %v1255 = vld [vmem:[#allocation2 + $0x78] sm:$0xff]
  %v1256 = vld [vmem:[#allocation2 + $0x80] sm:$0xff]
  %v1257 = vld [vmem:[#allocation2 + $0x88] sm:$0xff]
  %v1276 = vunpack.c.l.b16 %v1240
  %v1277 = vunpack.c.h.b16 %v1240
  %v1278 = vunpack.c.l.b16 %v1241
  %v1279 = vunpack.c.h.b16 %v1241
  %v1280 = vunpack.c.l.b16 %v1242
  %v1281 = vunpack.c.h.b16 %v1242
  %v1282 = vunpack.c.l.b16 %v1243
  %v1283 = vunpack.c.h.b16 %v1243
  %v1284 = vunpack.c.l.b16 %v1244
  %v1285 = vunpack.c.h.b16 %v1244
  %v1286 = vunpack.c.l.b16 %v1245
  %v1287 = vunpack.c.h.b16 %v1245
  %v1288 = vunpack.c.l.b16 %v1246
  %v1289 = vunpack.c.h.b16 %v1246
  %v1290 = vunpack.c.l.b16 %v1247
  %v1291 = vunpack.c.h.b16 %v1247
  %v1292 = vunpack.c.l.b16 %v1248
  %v1293 = vunpack.c.h.b16 %v1248
  %v1294 = vunpack.c.l.b16 %v1249
  %v1295 = vunpack.c.h.b16 %v1249
  %v1296 = vunpack.c.l.b16 %v1250
  %v1297 = vunpack.c.h.b16 %v1250
  %v1298 = vunpack.c.l.b16 %v1251
  %v1299 = vunpack.c.h.b16 %v1251
  %v1300 = vunpack.c.l.b16 %v1252
  %v1301 = vunpack.c.h.b16 %v1252
  %v1302 = vunpack.c.l.b16 %v1253
  %v1303 = vunpack.c.h.b16 %v1253
  %v1304 = vunpack.c.l.b16 %v1254
  %v1305 = vunpack.c.h.b16 %v1254
  %v1306 = vunpack.c.l.b16 %v1255
  %v1307 = vunpack.c.h.b16 %v1255
  %v1308 = vunpack.c.l.b16 %v1256
  %v1309 = vunpack.c.h.b16 %v1256
  %v1310 = vunpack.c.l.b16 %v1257
  %v1311 = vunpack.c.h.b16 %v1257
  %v1312 = vpack.c.b16 %v1280, %v1276
  %v1313 = vpack.c.b16 %v1281, %v1277
  %v1314 = vpack.c.b16 %v1282, %v1278
  %v1315 = vpack.c.b16 %v1283, %v1279
  %v1316 = vpack.c.b16 %v1288, %v1284
  %v1317 = vpack.c.b16 %v1289, %v1285
  %v1318 = vpack.c.b16 %v1290, %v1286
  %v1319 = vpack.c.b16 %v1291, %v1287
  %v1320 = vpack.c.b16 %v1296, %v1292
  %v1321 = vpack.c.b16 %v1297, %v1293
  %v1322 = vpack.c.b16 %v1298, %v1294
  %v1323 = vpack.c.b16 %v1299, %v1295
  %v1324 = vpack.c.b16 %v1304, %v1300
  %v1325 = vpack.c.b16 %v1305, %v1301
  %v1326 = vpack.c.b16 %v1306, %v1302
  %v1327 = vpack.c.b16 %v1307, %v1303
  %v1328 = vpack.c.b16 %v1308, %v1308
  %v1329 = vpack.c.b16 %v1309, %v1309
  %v1330 = vpack.c.b16 %v1310, %v1310
  %v1331 = vpack.c.b16 %v1311, %v1311
  %v1349 = vsel %vm626, %v1239, 0
  %v1352 = vsel %vm630, %v1328, 0
  %v1355 = vsel %vm630, %v1329, 0
  %v1358 = vsel %vm630, %v1330, 0
  %v1361 = vsel %vm630, %v1331, 0
  %1363 = vmatprep.subr.bf16.mxu0 %v1313
  %1364 = vmatpush1.bf16.msra.mxu0 %v1312
  %1365 = vmatprep.subr.bf16.mxu0 %v1317
  %1366 = vmatpush1.bf16.msra.mxu0 %v1316
  %1367 = vmatprep.subr.bf16.mxu0 %v1321
  %1368 = vmatpush1.bf16.msra.mxu0 %v1320
  %1369 = vmatprep.subr.bf16.mxu0 %v1325
  %1370 = vmatpush1.bf16.msra.mxu0 %v1324
  %1371 = vmatprep.subr.bf16.mxu0 %v1355
  %1372 = vmatpush1.bf16.msra.mxu0 %v1352
  %1373 = vmatprep.subr.bf16.mxu0 0
  %1374 = vmatpush1.bf16.msra.mxu0 0
  %1375 = vmatprep.subr.bf16.mxu0 0
  %1376 = vmatpush1.bf16.msra.mxu0 0
  %1377 = vmatprep.subr.bf16.mxu0 0
  %1378 = vmatpush1.bf16.msra.mxu0 0
  %1379 = vmatprep.subr.bf16.mxu0 0
  %1380 = vmatpush1.bf16.msra.mxu0 0
  %1381 = vmatprep.subr.bf16.mxu0 0
  %1382 = vmatpush1.bf16.msra.mxu0 0
  %1383 = vmatprep.subr.bf16.mxu0 0
  %1384 = vmatpush1.bf16.msra.mxu0 0
  %1385 = vmatprep.subr.bf16.mxu0 0
  %1386 = vmatpush1.bf16.msra.mxu0 0
  %1387 = vmatprep.subr.bf16.mxu0 0
  %1388 = vmatpush1.bf16.msra.mxu0 0
  %1389 = vmatprep.subr.bf16.mxu0 0
  %1390 = vmatpush1.bf16.msra.mxu0 0
  %1391 = vmatprep.subr.bf16.mxu0 0
  %1392 = vmatpush1.bf16.msra.mxu0 0
  %1393 = vmatprep.subr.bf16.mxu0 0
  %1394 = vmatpush1.bf16.msra.mxu0 0
  %1395 = vmatprep.mubr.bf16.mxu0 0
  %1396 = vmatmul.mubr.bf16.gmra.mrb[0].mxu0 %v1349
  %v1397 = vpop.f32.mrb[0].mxu0
  %v1398 = vadd.f32 0.0, %v1397
  %v1399 = vpop.f32.mrb[0].mxu0
  %v1400 = vadd.f32 0.0, %v1399
  %v1401 = vpop.f32.mrb[0].mxu0
  %v1402 = vpop.f32.mrb[0].mxu0
  %1403 = vdwg.mxu0
  %1404 = vmatprep.subr.bf16.mxu0 %v1315
  %1405 = vmatpush1.bf16.msra.mxu0 %v1314
  %1406 = vmatprep.subr.bf16.mxu0 %v1319
  %1407 = vmatpush1.bf16.msra.mxu0 %v1318
  %1408 = vmatprep.subr.bf16.mxu0 %v1323
  %1409 = vmatpush1.bf16.msra.mxu0 %v1322
  %1410 = vmatprep.subr.bf16.mxu0 %v1327
  %1411 = vmatpush1.bf16.msra.mxu0 %v1326
  %1412 = vmatprep.subr.bf16.mxu0 %v1361
  %1413 = vmatpush1.bf16.msra.mxu0 %v1358
  %1414 = vmatprep.subr.bf16.mxu0 0
  %1415 = vmatpush1.bf16.msra.mxu0 0
  %1416 = vmatprep.subr.bf16.mxu0 0
  %1417 = vmatpush1.bf16.msra.mxu0 0
  %1418 = vmatprep.subr.bf16.mxu0 0
  %1419 = vmatpush1.bf16.msra.mxu0 0
  %1420 = vmatprep.subr.bf16.mxu0 0
  %1421 = vmatpush1.bf16.msra.mxu0 0
  %1422 = vmatprep.subr.bf16.mxu0 0
  %1423 = vmatpush1.bf16.msra.mxu0 0
  %1424 = vmatprep.subr.bf16.mxu0 0
  %1425 = vmatpush1.bf16.msra.mxu0 0
  %1426 = vmatprep.subr.bf16.mxu0 0
  %1427 = vmatpush1.bf16.msra.mxu0 0
  %1428 = vmatprep.subr.bf16.mxu0 0
  %1429 = vmatpush1.bf16.msra.mxu0 0
  %1430 = vmatprep.subr.bf16.mxu0 0
  %1431 = vmatpush1.bf16.msra.mxu0 0
  %1432 = vmatprep.subr.bf16.mxu0 0
  %1433 = vmatpush1.bf16.msra.mxu0 0
  %1434 = vmatprep.subr.bf16.mxu0 0
  %1435 = vmatpush1.bf16.msra.mxu0 0
  %1436 = vmatprep.mubr.bf16.mxu0 0
  %1437 = vmatmul.mubr.bf16.gmra.mrb[0].mxu0 %v1349
  %v1438 = vpop.f32.mrb[0].mxu0
  %v1439 = vadd.f32 0.0, %v1438
  %v1440 = vpop.f32.mrb[0].mxu0
  %v1441 = vadd.f32 0.0, %v1440
  %v1442 = vpop.f32.mrb[0].mxu0
  %v1443 = vpop.f32.mrb[0].mxu0
  %1444 = vdwg.mxu0
  %v1445 = vadd.f32 %v1398, %v1400
  %v1446 = vadd.f32 %v1445, %v1439
  %v1447 = vadd.f32 %v1446, %v1441
  %1448 = vadd.xlane.f32.xlu0 %v1447
  %v1449 = vpop.xlane.xlu0 %1448
  %v1450 = vmul.f32 %v1449, %v730
  %v1451 = vsub.f32 %v1398, %v1450
  %v1452 = vsub.f32 %v1400, %v1450
  %v1453 = vsub.f32 %v1439, %v1450
  %v1454 = vsub.f32 %v1441, %v1450
  %v1455 = vmul.f32 %v1451, %v1451
  %v1456 = vmul.f32 %v1452, %v1452
  %v1457 = vmul.f32 %v1453, %v1453
  %v1458 = vmul.f32 %v1454, %v1454
  %v1459 = vadd.f32 %v1455, %v1456
  %v1460 = vadd.f32 %v1459, %v1457
  %v1461 = vadd.f32 %v1460, %v1458
  %1462 = vadd.xlane.f32.xlu0 %v1461
  %v1463 = vpop.xlane.xlu0 %1462
  %v1464 = vmul.f32 %v1463, %v730
  %v1465 = vld [vmem:[%s6] sm:$0xff]
  %v1466 = vadd.f32 %v1464, 1e-05
  %v1467 = vrsqrt.pop %v1466
  %v1468 = vmul.f32 %v1465, %v1467
  %1470 = vset.pattern.permute.xlu0 0
  %1471 = vperm.xlu0 %1470, %v1468
  %v1472 = vpop.permute.xlu0 %1471
  %v1474 = vmul.f32 %v1451, %v1472
  %v1475 = vmul.f32 %v1452, %v1472
  %v1476 = vmul.f32 %v1453, %v1472
  %v1477 = vmul.f32 %v1454, %v1472
  %v1478 = vld [vmem:[%s7] sm:$0xff]
  %1480 = vset.pattern.permute.xlu0 0
  %1481 = vperm.xlu0 %1480, %v1478
  %v1482 = vpop.permute.xlu0 %1481
  %v1484 = vadd.f32 %v1474, %v1482
  %v1485 = vadd.f32 %v1475, %v1482
  %v1486 = vadd.f32 %v1476, %v1482
  %v1487 = vadd.f32 %v1477, %v1482
  %v1488 = vmax.f32 %v1484, 0.0
  %v1489 = vmax.f32 %v1485, 0.0
  %v1490 = vmax.f32 %v1486, 0.0
  %v1491 = vmax.f32 %v1487, 0.0
  %1492 = vst [vmem:[%s8] sm:$0xff] %v1488
  %1493 = vst [vmem:[%s8 + $0x8] sm:$0xff] %v1489
  %1494 = vst [vmem:[%s8 + $0x10] sm:$0xff] %v1490
  %1495 = vst [vmem:[%s8 + $0x18] sm:$0xff] %v1491
  // Predicated region
  $region34: #{double_conv.1} parent=0 // pred_check
    _
  $region35: #{double_conv.1} parent=0 // pred_check_branch
    %1497 = sbr.rel (0) target = $region37
  $region36: #{double_conv.1} parent=0 // pred_region
    _
  $region37: #{double_conv.1} parent=0 // pred_fallthru
    _
  // Predicated region
  $region38: #{double_conv.1} parent=0 // pred_check
    _
  $region39: #{double_conv.1} parent=0 // pred_check_branch
    %1499 = sbr.rel (0) target = $region41
  $region40: #{double_conv.1} parent=0 // pred_region
    _
  $region41: #{double_conv.1} parent=0 // pred_fallthru
    _

</llo_original>
